<compile_context>
chip_gen: v6e
topology: v6e:2x2x1
jax: 0.10.0
libtpu: 0.0.40
codegen_flags: <defaults>
</compile_context>

<pallas_src>
import jax
import jax.numpy as jnp
from jax.experimental import pallas as pl
from jax.experimental.pallas import tpu as pltpu

IN_DIM = 28 * 28          # 784
H1 = 256
H2 = 64
H2_PAD = 128              # bottleneck zero-padded to one full lane group (exact)
MAX_BATCH_TILE = 1024     # large M tile: fills MXU, amortizes grid-step overhead


def _round_up(v, m):
    return ((v + m - 1) // m) * m


def dae_kernel(x_ref,
               w1_ref, b1_ref,
               w2_ref, b2_ref,
               w3_ref, b3_ref,
               w4_ref, b4_ref,
               o_ref):
    """Fused 4-layer MLP (encoder + decoder) for one batch tile.

    Matmuls run on the MXU with f32 accumulation; bias / ReLU / sigmoid stay
    f32 on the VPU/EUP (works for bf16 weights on all generations)."""
    wdt = w1_ref.dtype
    x = x_ref[...].astype(wdt)                                          # (TB, 784)

    # encoder
    h = jnp.dot(x, w1_ref[...], preferred_element_type=jnp.float32) + b1_ref[...]
    h = jnp.maximum(h, 0.0)                                             # (TB, 256)
    h = jnp.dot(h.astype(wdt), w2_ref[...],
                preferred_element_type=jnp.float32) + b2_ref[...]
    h = jnp.maximum(h, 0.0)                                             # (TB, 128) (64 zero-padded)

    # decoder
    h = jnp.dot(h.astype(wdt), w3_ref[...],
                preferred_element_type=jnp.float32) + b3_ref[...]
    h = jnp.maximum(h, 0.0)                                             # (TB, 256)
    h = jnp.dot(h.astype(wdt), w4_ref[...],
                preferred_element_type=jnp.float32) + b4_ref[...]
    o_ref[...] = jax.nn.sigmoid(h)                                      # (TB, 784)


def init_params(key):
    """Deterministic parameter init mirroring nn.Linear shapes.

    Weights are (in_features, out_features) so the kernel does x @ W directly."""
    def linear(k, fan_in, fan_out):
        kw, kb = jax.random.split(k)
        bound = 1.0 / jnp.sqrt(jnp.float32(fan_in))
        w = jax.random.uniform(kw, (fan_in, fan_out), jnp.float32, -bound, bound)
        b = jax.random.uniform(kb, (1, fan_out), jnp.float32, -bound, bound)
        return w, b

    k1, k2, k3, k4 = jax.random.split(key, 4)
    w1, b1 = linear(k1, IN_DIM, H1)
    w2, b2 = linear(k2, H1, H2)
    w3, b3 = linear(k3, H2, H1)
    w4, b4 = linear(k4, H1, IN_DIM)
    return (w1, b1, w2, b2, w3, b3, w4, b4)


def prepare_params(params, weights_dtype=jnp.bfloat16):
    """One-time weight prep: zero-pad H2 64->128 and cast MXU operands.

    Zero padding keeps the math exact: padded h2 lanes are exactly 0 after
    ReLU and the padded w3 rows contribute 0. Biases stay f32 (bias add and
    activations run in f32 on the VPU). Call this ONCE and reuse the result."""
    w1, b1, w2, b2, w3, b3, w4, b4 = params
    w2 = jnp.pad(w2, ((0, 0), (0, H2_PAD - H2)))
    b2 = jnp.pad(b2, ((0, 0), (0, H2_PAD - H2)))
    w3 = jnp.pad(w3, ((0, H2_PAD - H2), (0, 0)))
    cast = lambda w: w.astype(weights_dtype)
    return (cast(w1), b1, cast(w2), b2, cast(w3), b3, cast(w4), b4)


def _choose_tile(n):
    """Batch tile: sublane aligned, <= MAX_BATCH_TILE, and >=2 grid steps
    whenever there is enough work so v7x's two TensorCores both get a share."""
    n8 = _round_up(max(n, 1), 8)
    steps = -(-n8 // MAX_BATCH_TILE)          # ceil
    if steps == 1 and n8 > 256:
        steps = 2
    return _round_up(-(-n8 // steps), 8)


def _vmem_limit_bytes(tb, kp):
    """Derive the scoped-VMEM request from the actual tile footprint."""
    param_bytes = sum(int(p.size) * p.dtype.itemsize for p in kp)     # single-buffered
    io_bytes = 2 * (tb * IN_DIM * 4) * 2                              # x + out, double-buffered
    interm_bytes = tb * (H1 + H2_PAD + H1 + IN_DIM) * 4               # f32 intermediates
    budget = int((param_bytes + io_bytes + interm_bytes) * 1.25) + (2 << 20)
    return int(min(max(budget, 16 << 20), 96 << 20))


@jax.jit
def dae_forward(x, prepared_params):
    """x: (N, 1, 28, 28) or (N, 784) float32 -> (N, 784) float32.

    `prepared_params` must come from prepare_params(...)."""
    n = x.shape[0]
    xf = x.reshape(n, IN_DIM).astype(jnp.float32)

    tb = _choose_tile(n)
    n_pad = tb * ((n + tb - 1) // tb)
    if n_pad != n:
        # Only ragged batch sizes pay for this extra HBM copy.
        xf = jnp.pad(xf, ((0, n_pad - n), (0, 0)))

    kp = prepared_params
    # Constant index_map -> single-buffer the resident parameters (saves the
    # dead second pipeline buffer; matters most on v7x's 64 MiB VMEM).
    param_specs = [
        pl.BlockSpec(p.shape, lambda i: (0, 0), pipeline_mode=pl.Buffered(1))
        for p in kp
    ]

    out = pl.pallas_call(
        dae_kernel,
        out_shape=jax.ShapeDtypeStruct((n_pad, IN_DIM), jnp.float32),
        grid_spec=pltpu.PrefetchScalarGridSpec(
            num_scalar_prefetch=0,
            grid=(n_pad // tb,),
            in_specs=[pl.BlockSpec((tb, IN_DIM), lambda i: (i, 0))] + param_specs,
            out_specs=pl.BlockSpec((tb, IN_DIM), lambda i: (i, 0)),
        ),
        compiler_params=pltpu.CompilerParams(
            dimension_semantics=("parallel",),
            vmem_limit_bytes=_vmem_limit_bytes(tb, kp),
        ),
    )(xf, *kp)

    if n_pad != n:
        out = out[:n]
    return out


def dae_forward_ref(x, params):
    """Pure-JAX reference for correctness checking (unpadded f32 params)."""
    w1, b1, w2, b2, w3, b3, w4, b4 = params
    h = x.reshape(x.shape[0], IN_DIM).astype(jnp.float32)
    h = jnp.maximum(h @ w1 + b1, 0.0)
    h = jnp.maximum(h @ w2 + b2, 0.0)
    h = jnp.maximum(h @ w3 + b3, 0.0)
    return jax.nn.sigmoid(h @ w4 + b4)


# TODO(synk): DAE.loss (binary_cross_entropy) is not part of forward() and is
# not implemented as a kernel.

if __name__ == "__main__":
    key = jax.random.PRNGKey(0)
    k_params, k_x, k_x2 = jax.random.split(key, 3)

    params = init_params(k_params)
    # One-time prep (hoisted out of the forward path).
    params_f32 = prepare_params(params, jnp.float32)    # exactness check
    params_bf16 = prepare_params(params, jnp.bfloat16)  # production default

    # MNIST-like input, batch=8, NCHW
    x = jax.random.uniform(k_x, (8, 1, 28, 28), jnp.float32)
    y_ref = dae_forward_ref(x, params)

    y32 = jax.block_until_ready(dae_forward(x, params_f32))
    assert y32.shape == (8, IN_DIM)
    assert jnp.allclose(y32, y_ref, atol=1e-5, rtol=1e-5), "f32 mismatch vs reference"

    y16 = jax.block_until_ready(dae_forward(x, params_bf16))
    assert y16.shape == (8, IN_DIM)
    assert jnp.allclose(y16, y_ref, atol=2e-2, rtol=2e-2), "bf16 mismatch vs reference"

    # ragged batch exercises the conditional-pad / tail path
    x2 = jax.random.uniform(k_x2, (13, 1, 28, 28), jnp.float32)
    y2 = jax.block_until_ready(dae_forward(x2, params_f32))
    y2_ref = dae_forward_ref(x2, params)
    assert y2.shape == (13, IN_DIM)
    assert jnp.allclose(y2, y2_ref, atol=1e-5, rtol=1e-5), "mismatch vs reference (ragged)"

    print("KERNEL_OK")
</pallas_src>

<mosaic_0001>
module attributes {stable_mosaic.version = 11 : i64} {
  func.func @dae_kernel(%arg0: i32, %arg1: memref<8x784xf32, #tpu.memory_space<vmem>>, %arg2: memref<784x256xf32, #tpu.memory_space<vmem>>, %arg3: memref<1x256xf32, #tpu.memory_space<vmem>>, %arg4: memref<256x128xf32, #tpu.memory_space<vmem>>, %arg5: memref<1x128xf32, #tpu.memory_space<vmem>>, %arg6: memref<128x256xf32, #tpu.memory_space<vmem>>, %arg7: memref<1x256xf32, #tpu.memory_space<vmem>>, %arg8: memref<256x784xf32, #tpu.memory_space<vmem>>, %arg9: memref<1x784xf32, #tpu.memory_space<vmem>>, %arg10: memref<8x784xf32, #tpu.memory_space<vmem>>) attributes {dimension_semantics = [#tpu.dimension_semantics<parallel>], iteration_bounds = array<i64: 1>, scalar_prefetch = 0 : i64, scratch_operands = 0 : i64, tpu.core_type = #tpu.core_type<tc>, window_params = [{transform_indices = @transform_0, window_bounds = array<i64: 8, 784>}, {pipeline_mode = #tpu.pipeline_mode<synchronous>, transform_indices = @transform_1, window_bounds = array<i64: 784, 256>}, {pipeline_mode = #tpu.pipeline_mode<synchronous>, transform_indices = @transform_2, window_bounds = array<i64: 1, 256>}, {pipeline_mode = #tpu.pipeline_mode<synchronous>, transform_indices = @transform_3, window_bounds = array<i64: 256, 128>}, {pipeline_mode = #tpu.pipeline_mode<synchronous>, transform_indices = @transform_4, window_bounds = array<i64: 1, 128>}, {pipeline_mode = #tpu.pipeline_mode<synchronous>, transform_indices = @transform_5, window_bounds = array<i64: 128, 256>}, {pipeline_mode = #tpu.pipeline_mode<synchronous>, transform_indices = @transform_6, window_bounds = array<i64: 1, 256>}, {pipeline_mode = #tpu.pipeline_mode<synchronous>, transform_indices = @transform_7, window_bounds = array<i64: 256, 784>}, {pipeline_mode = #tpu.pipeline_mode<synchronous>, transform_indices = @transform_8, window_bounds = array<i64: 1, 784>}, {transform_indices = @transform_9, window_bounds = array<i64: 8, 784>}]} {
    %c0 = arith.constant 0 : index
    %c0_0 = arith.constant 0 : index
    %0 = vector.load %arg1[%c0, %c0_0] : memref<8x784xf32, #tpu.memory_space<vmem>>, vector<8x784xf32>
    %c0_1 = arith.constant 0 : index
    %c0_2 = arith.constant 0 : index
    %1 = vector.load %arg2[%c0_1, %c0_2] : memref<784x256xf32, #tpu.memory_space<vmem>>, vector<784x256xf32>
    %cst = arith.constant dense<0.000000e+00> : vector<8x256xf32>
    %2 = tpu.matmul %0, %1, %cst {dimension_numbers = #tpu.dot_dimension_numbers<[1], [0], [0], [1], [0, 0, 1, 1], [], []>} : vector<8x784xf32>, vector<784x256xf32>, vector<8x256xf32> -> vector<8x256xf32>
    %c0_3 = arith.constant 0 : index
    %c0_4 = arith.constant 0 : index
    %3 = vector.load %arg3[%c0_3, %c0_4] : memref<1x256xf32, #tpu.memory_space<vmem>>, vector<1x256xf32>
    %4 = vector.broadcast %3 : vector<1x256xf32> to vector<8x256xf32>
    %5 = arith.addf %2, %4 : vector<8x256xf32>
    %cst_5 = arith.constant 0.000000e+00 : f32
    %6 = vector.broadcast %cst_5 : f32 to vector<8x256xf32>
    %7 = arith.maximumf %5, %6 : vector<8x256xf32>
    %c0_6 = arith.constant 0 : index
    %c0_7 = arith.constant 0 : index
    %8 = vector.load %arg4[%c0_6, %c0_7] : memref<256x128xf32, #tpu.memory_space<vmem>>, vector<256x128xf32>
    %cst_8 = arith.constant dense<0.000000e+00> : vector<8x128xf32>
    %9 = tpu.matmul %7, %8, %cst_8 {dimension_numbers = #tpu.dot_dimension_numbers<[1], [0], [0], [1], [0, 0, 1, 1], [], []>} : vector<8x256xf32>, vector<256x128xf32>, vector<8x128xf32> -> vector<8x128xf32>
    %c0_9 = arith.constant 0 : index
    %c0_10 = arith.constant 0 : index
    %10 = vector.load %arg5[%c0_9, %c0_10] : memref<1x128xf32, #tpu.memory_space<vmem>>, vector<1x128xf32>
    %11 = vector.broadcast %10 : vector<1x128xf32> to vector<8x128xf32>
    %12 = arith.addf %9, %11 : vector<8x128xf32>
    %cst_11 = arith.constant 0.000000e+00 : f32
    %13 = vector.broadcast %cst_11 : f32 to vector<8x128xf32>
    %14 = arith.maximumf %12, %13 : vector<8x128xf32>
    %c0_12 = arith.constant 0 : index
    %c0_13 = arith.constant 0 : index
    %15 = vector.load %arg6[%c0_12, %c0_13] : memref<128x256xf32, #tpu.memory_space<vmem>>, vector<128x256xf32>
    %cst_14 = arith.constant dense<0.000000e+00> : vector<8x256xf32>
    %16 = tpu.matmul %14, %15, %cst_14 {dimension_numbers = #tpu.dot_dimension_numbers<[1], [0], [0], [1], [0, 0, 1, 1], [], []>} : vector<8x128xf32>, vector<128x256xf32>, vector<8x256xf32> -> vector<8x256xf32>
    %c0_15 = arith.constant 0 : index
    %c0_16 = arith.constant 0 : index
    %17 = vector.load %arg7[%c0_15, %c0_16] : memref<1x256xf32, #tpu.memory_space<vmem>>, vector<1x256xf32>
    %18 = vector.broadcast %17 : vector<1x256xf32> to vector<8x256xf32>
    %19 = arith.addf %16, %18 : vector<8x256xf32>
    %cst_17 = arith.constant 0.000000e+00 : f32
    %20 = vector.broadcast %cst_17 : f32 to vector<8x256xf32>
    %21 = arith.maximumf %19, %20 : vector<8x256xf32>
    %c0_18 = arith.constant 0 : index
    %c0_19 = arith.constant 0 : index
    %22 = vector.load %arg8[%c0_18, %c0_19] : memref<256x784xf32, #tpu.memory_space<vmem>>, vector<256x784xf32>
    %cst_20 = arith.constant dense<0.000000e+00> : vector<8x784xf32>
    %23 = tpu.matmul %21, %22, %cst_20 {dimension_numbers = #tpu.dot_dimension_numbers<[1], [0], [0], [1], [0, 0, 1, 1], [], []>} : vector<8x256xf32>, vector<256x784xf32>, vector<8x784xf32> -> vector<8x784xf32>
    %c0_21 = arith.constant 0 : index
    %c0_22 = arith.constant 0 : index
    %24 = vector.load %arg9[%c0_21, %c0_22] : memref<1x784xf32, #tpu.memory_space<vmem>>, vector<1x784xf32>
    %25 = vector.broadcast %24 : vector<1x784xf32> to vector<8x784xf32>
    %26 = arith.addf %23, %25 : vector<8x784xf32>
    %27 = arith.negf %26 : vector<8x784xf32>
    %28 = math.exp %27 : vector<8x784xf32>
    %cst_23 = arith.constant 1.000000e+00 : f32
    %29 = vector.broadcast %cst_23 : f32 to vector<8x784xf32>
    %30 = arith.addf %29, %28 : vector<8x784xf32>
    %31 = arith.divf %29, %30 : vector<8x784xf32>
    %c0_24 = arith.constant 0 : index
    %c0_25 = arith.constant 0 : index
    %32 = vector.load %arg10[%c0_24, %c0_25] : memref<8x784xf32, #tpu.memory_space<vmem>>, vector<8x784xf32>
    tpu.vector_store %arg10[%c0_24, %c0_25], %31 {strides = array<i32>} : memref<8x784xf32, #tpu.memory_space<vmem>>, vector<8x784xf32>,
    return
  }
  func.func @transform_0(%arg0: i32) -> (i32, i32) {
    %c0_i32 = arith.constant 0 : i32
    %c0_i32_0 = arith.constant 0 : i32
    return %arg0, %c0_i32 : i32, i32
  }
  func.func @transform_1(%arg0: i32) -> (i32, i32) {
    %c0_i32 = arith.constant 0 : i32
    %c0_i32_0 = arith.constant 0 : i32
    %c0_i32_1 = arith.constant 0 : i32
    return %c0_i32, %c0_i32_0 : i32, i32
  }
  func.func @transform_2(%arg0: i32) -> (i32, i32) {
    %c0_i32 = arith.constant 0 : i32
    %c0_i32_0 = arith.constant 0 : i32
    %c0_i32_1 = arith.constant 0 : i32
    return %c0_i32, %c0_i32_0 : i32, i32
  }
  func.func @transform_3(%arg0: i32) -> (i32, i32) {
    %c0_i32 = arith.constant 0 : i32
    %c0_i32_0 = arith.constant 0 : i32
    %c0_i32_1 = arith.constant 0 : i32
    return %c0_i32, %c0_i32_0 : i32, i32
  }
  func.func @transform_4(%arg0: i32) -> (i32, i32) {
    %c0_i32 = arith.constant 0 : i32
    %c0_i32_0 = arith.constant 0 : i32
    %c0_i32_1 = arith.constant 0 : i32
    return %c0_i32, %c0_i32_0 : i32, i32
  }
  func.func @transform_5(%arg0: i32) -> (i32, i32) {
    %c0_i32 = arith.constant 0 : i32
    %c0_i32_0 = arith.constant 0 : i32
    %c0_i32_1 = arith.constant 0 : i32
    return %c0_i32, %c0_i32_0 : i32, i32
  }
  func.func @transform_6(%arg0: i32) -> (i32, i32) {
    %c0_i32 = arith.constant 0 : i32
    %c0_i32_0 = arith.constant 0 : i32
    %c0_i32_1 = arith.constant 0 : i32
    return %c0_i32, %c0_i32_0 : i32, i32
  }
  func.func @transform_7(%arg0: i32) -> (i32, i32) {
    %c0_i32 = arith.constant 0 : i32
    %c0_i32_0 = arith.constant 0 : i32
    %c0_i32_1 = arith.constant 0 : i32
    return %c0_i32, %c0_i32_0 : i32, i32
  }
  func.func @transform_8(%arg0: i32) -> (i32, i32) {
    %c0_i32 = arith.constant 0 : i32
    %c0_i32_0 = arith.constant 0 : i32
    %c0_i32_1 = arith.constant 0 : i32
    return %c0_i32, %c0_i32_0 : i32, i32
  }
  func.func @transform_9(%arg0: i32) -> (i32, i32) {
    %c0_i32 = arith.constant 0 : i32
    %c0_i32_0 = arith.constant 0 : i32
    return %arg0, %c0_i32 : i32, i32
  }
}

</mosaic_0001>

<llo_original>
// kernel: dae_forward.1
$region0: #{dae_forward.1}
  #allocation0 [shape = 'u32[]', space=smem, size = 0x4, offset = 0x4, fixed_abs, tag = 'smem constant byte address 0x4 - core index']
  #allocation1 [shape = 'u32[144,128]{1,0:T(1,128)}', space=vmem, size = 0x12000, scoped, tag = 'internal scratch']
  %s0 = inlined_call_operand.vmem [shape: f32[8,784], index: 0, kind: input, shape index: {}]
  %s1 = inlined_call_operand.vmem [shape: f32[784,256], index: 1, kind: input, shape index: {}]
  %s2 = inlined_call_operand.vmem [shape: f32[1,256], index: 2, kind: input, shape index: {}]
  %s3 = inlined_call_operand.vmem [shape: f32[256,128], index: 3, kind: input, shape index: {}]
  %s4 = inlined_call_operand.vmem [shape: f32[1,128], index: 4, kind: input, shape index: {}]
  %s5 = inlined_call_operand.vmem [shape: f32[128,256], index: 5, kind: input, shape index: {}]
  %s6 = inlined_call_operand.vmem [shape: f32[1,256], index: 6, kind: input, shape index: {}]
  %s7 = inlined_call_operand.vmem [shape: f32[256,784], index: 7, kind: input, shape index: {}]
  %s8 = inlined_call_operand.vmem [shape: f32[1,784], index: 8, kind: input, shape index: {}]
  %s9 = inlined_call_operand.hbm [shape: f32[8,784], index: 9, kind: output, shape index: {}]
  %s10 = sld [smem:[#allocation0]]
  $region46: #{dae_forward.1} parent=0
    _
  %s12 = ssub.s32 1, %s10
  %s13 = scalar_select 0, %s12, %s10
  $region1: #{dae_forward.1} parent=0
    #allocation2 [shape = 'u8[28672]{0}', space=vmem, size = 0x7000, scoped, tag = 'output window, operand 0, single buffered']
    #allocation3 [shape = 's32[1]{0}', space=sflag, size = 0x4, scoped, tag = 'scoped memory for dae_forward.1']
    %14 = vsyncpa [#allocation3], 0
    // Predicated region
    $region2: #{dae_forward.1} parent=1 // pred_check
      _
    $region3: #{dae_forward.1} parent=1 // pred_check_branch
      %16 = sbr.rel (0) target = $region5
    $region4: #{dae_forward.1} parent=1 // pred_region
      _
    $region5: #{dae_forward.1} parent=1 // pred_fallthru
      _
    // Predicated region
    $region6: #{dae_forward.1} parent=1 // pred_check
      _
    $region7: #{dae_forward.1} parent=1 // pred_check_branch
      %18 = sbr.rel (0) target = $region9
    $region8: #{dae_forward.1} parent=1 // pred_region
      _
    $region9: #{dae_forward.1} parent=1 // pred_fallthru
      _
    // Predicated region
    $region10: #{dae_forward.1} parent=1 // pred_check
      _
    $region11: #{dae_forward.1} parent=1 // pred_check_branch
      %20 = sbr.rel (0) target = $region13
    $region12: #{dae_forward.1} parent=1 // pred_region
      _
    $region13: #{dae_forward.1} parent=1 // pred_fallthru
      _
    // Predicated region
    $region14: #{dae_forward.1} parent=1 // pred_check
      _
    $region15: #{dae_forward.1} parent=1 // pred_check_branch
      %22 = sbr.rel (0) target = $region17
    $region16: #{dae_forward.1} parent=1 // pred_region
      _
    $region17: #{dae_forward.1} parent=1 // pred_fallthru
      _
    // Predicated region
    $region18: #{dae_forward.1} parent=1 // pred_check
      _
    $region19: #{dae_forward.1} parent=1 // pred_check_branch
      %24 = sbr.rel (0) target = $region21
    $region20: #{dae_forward.1} parent=1 // pred_region
      _
    $region21: #{dae_forward.1} parent=1 // pred_fallthru
      _
    // Predicated region
    $region22: #{dae_forward.1} parent=1 // pred_check
      _
    $region23: #{dae_forward.1} parent=1 // pred_check_branch
      %26 = sbr.rel (0) target = $region25
    $region24: #{dae_forward.1} parent=1 // pred_region
      _
    $region25: #{dae_forward.1} parent=1 // pred_fallthru
      _
    // Predicated region
    $region26: #{dae_forward.1} parent=1 // pred_check
      _
    $region27: #{dae_forward.1} parent=1 // pred_check_branch
      %28 = sbr.rel (0) target = $region29
    $region28: #{dae_forward.1} parent=1 // pred_region
      _
    $region29: #{dae_forward.1} parent=1 // pred_fallthru
      _
    // Predicated region
    $region30: #{dae_forward.1} parent=1 // pred_check
      _
    $region31: #{dae_forward.1} parent=1 // pred_check_branch
      %30 = sbr.rel (0) target = $region33
    $region32: #{dae_forward.1} parent=1 // pred_region
      _
    $region33: #{dae_forward.1} parent=1 // pred_fallthru
      _
    // Predicated region
    $region34: #{dae_forward.1} parent=1 // pred_check
      _
    $region35: #{dae_forward.1} parent=1 // pred_check_branch
      %32 = sbr.rel (0) target = $region37
    $region36: #{dae_forward.1} parent=1 // pred_region
      _
    $region37: #{dae_forward.1} parent=1 // pred_fallthru
      _
    %v33 = vld [vmem:[%s0] sm:$0xff]
    %v34 = vld [vmem:[%s0 + $0x8] sm:$0xff]
    %v35 = vld [vmem:[%s0 + $0x10] sm:$0xff]
    %v36 = vld [vmem:[%s0 + $0x18] sm:$0xff]
    %v37 = vld [vmem:[%s0 + $0x20] sm:$0xff]
    %v38 = vld [vmem:[%s0 + $0x28] sm:$0xff]
    %v39 = vld [vmem:[%s0 + $0x30] sm:$0xff]
    %v40 = vld [vmem:[%s1] sm:$0xff]
    %v41 = vld [vmem:[%s1 + $0x8] sm:$0xff]
    %v42 = vld [vmem:[%s1 + $0x10] sm:$0xff]
    %v43 = vld [vmem:[%s1 + $0x18] sm:$0xff]
    %v44 = vld [vmem:[%s1 + $0x20] sm:$0xff]
    %v45 = vld [vmem:[%s1 + $0x28] sm:$0xff]
    %v46 = vld [vmem:[%s1 + $0x30] sm:$0xff]
    %v47 = vld [vmem:[%s1 + $0x38] sm:$0xff]
    %v48 = vld [vmem:[%s1 + $0x40] sm:$0xff]
    %v49 = vld [vmem:[%s1 + $0x48] sm:$0xff]
    %v50 = vld [vmem:[%s1 + $0x50] sm:$0xff]
    %v51 = vld [vmem:[%s1 + $0x58] sm:$0xff]
    %v52 = vld [vmem:[%s1 + $0x60] sm:$0xff]
    %v53 = vld [vmem:[%s1 + $0x68] sm:$0xff]
    %v54 = vld [vmem:[%s1 + $0x70] sm:$0xff]
    %v55 = vld [vmem:[%s1 + $0x78] sm:$0xff]
    %v56 = vld [vmem:[%s1 + $0x80] sm:$0xff]
    %v57 = vld [vmem:[%s1 + $0x88] sm:$0xff]
    %v58 = vld [vmem:[%s1 + $0x90] sm:$0xff]
    %v59 = vld [vmem:[%s1 + $0x98] sm:$0xff]
    %v60 = vld [vmem:[%s1 + $0xa0] sm:$0xff]
    %v61 = vld [vmem:[%s1 + $0xa8] sm:$0xff]
    %v62 = vld [vmem:[%s1 + $0xb0] sm:$0xff]
    %v63 = vld [vmem:[%s1 + $0xb8] sm:$0xff]
    %v64 = vld [vmem:[%s1 + $0xc0] sm:$0xff]
    %v65 = vld [vmem:[%s1 + $0xc8] sm:$0xff]
    %v66 = vld [vmem:[%s1 + $0xd0] sm:$0xff]
    %v67 = vld [vmem:[%s1 + $0xd8] sm:$0xff]
    %v68 = vld [vmem:[%s1 + $0xe0] sm:$0xff]
    %v69 = vld [vmem:[%s1 + $0xe8] sm:$0xff]
    %v70 = vld [vmem:[%s1 + $0xf0] sm:$0xff]
    %v71 = vld [vmem:[%s1 + $0xf8] sm:$0xff]
    %v72 = vld [vmem:[%s1 + $0x100] sm:$0xff]
    %v73 = vld [vmem:[%s1 + $0x108] sm:$0xff]
    %v74 = vld [vmem:[%s1 + $0x110] sm:$0xff]
    %v75 = vld [vmem:[%s1 + $0x118] sm:$0xff]
    %v76 = vld [vmem:[%s1 + $0x120] sm:$0xff]
    %v77 = vld [vmem:[%s1 + $0x128] sm:$0xff]
    %v78 = vld [vmem:[%s1 + $0x130] sm:$0xff]
    %v79 = vld [vmem:[%s1 + $0x138] sm:$0xff]
    %v80 = vld [vmem:[%s1 + $0x140] sm:$0xff]
    %v81 = vld [vmem:[%s1 + $0x148] sm:$0xff]
    %v82 = vld [vmem:[%s1 + $0x150] sm:$0xff]
    %v83 = vld [vmem:[%s1 + $0x158] sm:$0xff]
    %v84 = vld [vmem:[%s1 + $0x160] sm:$0xff]
    %v85 = vld [vmem:[%s1 + $0x168] sm:$0xff]
    %v86 = vld [vmem:[%s1 + $0x170] sm:$0xff]
    %v87 = vld [vmem:[%s1 + $0x178] sm:$0xff]
    %v88 = vld [vmem:[%s1 + $0x180] sm:$0xff]
    %v89 = vld [vmem:[%s1 + $0x188] sm:$0xff]
    %v90 = vld [vmem:[%s1 + $0x190] sm:$0xff]
    %v91 = vld [vmem:[%s1 + $0x198] sm:$0xff]
    %v92 = vld [vmem:[%s1 + $0x1a0] sm:$0xff]
    %v93 = vld [vmem:[%s1 + $0x1a8] sm:$0xff]
    %v94 = vld [vmem:[%s1 + $0x1b0] sm:$0xff]
    %v95 = vld [vmem:[%s1 + $0x1b8] sm:$0xff]
    %v96 = vld [vmem:[%s1 + $0x1c0] sm:$0xff]
    %v97 = vld [vmem:[%s1 + $0x1c8] sm:$0xff]
    %v98 = vld [vmem:[%s1 + $0x1d0] sm:$0xff]
    %v99 = vld [vmem:[%s1 + $0x1d8] sm:$0xff]
    %v100 = vld [vmem:[%s1 + $0x1e0] sm:$0xff]
    %v101 = vld [vmem:[%s1 + $0x1e8] sm:$0xff]
    %v102 = vld [vmem:[%s1 + $0x1f0] sm:$0xff]
    %v103 = vld [vmem:[%s1 + $0x1f8] sm:$0xff]
    %v104 = vld [vmem:[%s1 + $0x200] sm:$0xff]
    %v105 = vld [vmem:[%s1 + $0x208] sm:$0xff]
    %v106 = vld [vmem:[%s1 + $0x210] sm:$0xff]
    %v107 = vld [vmem:[%s1 + $0x218] sm:$0xff]
    %v108 = vld [vmem:[%s1 + $0x220] sm:$0xff]
    %v109 = vld [vmem:[%s1 + $0x228] sm:$0xff]
    %v110 = vld [vmem:[%s1 + $0x230] sm:$0xff]
    %v111 = vld [vmem:[%s1 + $0x238] sm:$0xff]
    %v112 = vld [vmem:[%s1 + $0x240] sm:$0xff]
    %v113 = vld [vmem:[%s1 + $0x248] sm:$0xff]
    %v114 = vld [vmem:[%s1 + $0x250] sm:$0xff]
    %v115 = vld [vmem:[%s1 + $0x258] sm:$0xff]
    %v116 = vld [vmem:[%s1 + $0x260] sm:$0xff]
    %v117 = vld [vmem:[%s1 + $0x268] sm:$0xff]
    %v118 = vld [vmem:[%s1 + $0x270] sm:$0xff]
    %v119 = vld [vmem:[%s1 + $0x278] sm:$0xff]
    %v120 = vld [vmem:[%s1 + $0x280] sm:$0xff]
    %v121 = vld [vmem:[%s1 + $0x288] sm:$0xff]
    %v122 = vld [vmem:[%s1 + $0x290] sm:$0xff]
    %v123 = vld [vmem:[%s1 + $0x298] sm:$0xff]
    %v124 = vld [vmem:[%s1 + $0x2a0] sm:$0xff]
    %v125 = vld [vmem:[%s1 + $0x2a8] sm:$0xff]
    %v126 = vld [vmem:[%s1 + $0x2b0] sm:$0xff]
    %v127 = vld [vmem:[%s1 + $0x2b8] sm:$0xff]
    %v128 = vld [vmem:[%s1 + $0x2c0] sm:$0xff]
    %v129 = vld [vmem:[%s1 + $0x2c8] sm:$0xff]
    %v130 = vld [vmem:[%s1 + $0x2d0] sm:$0xff]
    %v131 = vld [vmem:[%s1 + $0x2d8] sm:$0xff]
    %v132 = vld [vmem:[%s1 + $0x2e0] sm:$0xff]
    %v133 = vld [vmem:[%s1 + $0x2e8] sm:$0xff]
    %v134 = vld [vmem:[%s1 + $0x2f0] sm:$0xff]
    %v135 = vld [vmem:[%s1 + $0x2f8] sm:$0xff]
    %v136 = vld [vmem:[%s1 + $0x300] sm:$0xff]
    %v137 = vld [vmem:[%s1 + $0x308] sm:$0xff]
    %v138 = vld [vmem:[%s1 + $0x310] sm:$0xff]
    %v139 = vld [vmem:[%s1 + $0x318] sm:$0xff]
    %v140 = vld [vmem:[%s1 + $0x320] sm:$0xff]
    %v141 = vld [vmem:[%s1 + $0x328] sm:$0xff]
    %v142 = vld [vmem:[%s1 + $0x330] sm:$0xff]
    %v143 = vld [vmem:[%s1 + $0x338] sm:$0xff]
    %v144 = vld [vmem:[%s1 + $0x340] sm:$0xff]
    %v145 = vld [vmem:[%s1 + $0x348] sm:$0xff]
    %v146 = vld [vmem:[%s1 + $0x350] sm:$0xff]
    %v147 = vld [vmem:[%s1 + $0x358] sm:$0xff]
    %v148 = vld [vmem:[%s1 + $0x360] sm:$0xff]
    %v149 = vld [vmem:[%s1 + $0x368] sm:$0xff]
    %v150 = vld [vmem:[%s1 + $0x370] sm:$0xff]
    %v151 = vld [vmem:[%s1 + $0x378] sm:$0xff]
    %v152 = vld [vmem:[%s1 + $0x380] sm:$0xff]
    %v153 = vld [vmem:[%s1 + $0x388] sm:$0xff]
    %v154 = vld [vmem:[%s1 + $0x390] sm:$0xff]
    %v155 = vld [vmem:[%s1 + $0x398] sm:$0xff]
    %v156 = vld [vmem:[%s1 + $0x3a0] sm:$0xff]
    %v157 = vld [vmem:[%s1 + $0x3a8] sm:$0xff]
    %v158 = vld [vmem:[%s1 + $0x3b0] sm:$0xff]
    %v159 = vld [vmem:[%s1 + $0x3b8] sm:$0xff]
    %v160 = vld [vmem:[%s1 + $0x3c0] sm:$0xff]
    %v161 = vld [vmem:[%s1 + $0x3c8] sm:$0xff]
    %v162 = vld [vmem:[%s1 + $0x3d0] sm:$0xff]
    %v163 = vld [vmem:[%s1 + $0x3d8] sm:$0xff]
    %v164 = vld [vmem:[%s1 + $0x3e0] sm:$0xff]
    %v165 = vld [vmem:[%s1 + $0x3e8] sm:$0xff]
    %v166 = vld [vmem:[%s1 + $0x3f0] sm:$0xff]
    %v167 = vld [vmem:[%s1 + $0x3f8] sm:$0xff]
    %v168 = vld [vmem:[%s1 + $0x400] sm:$0xff]
    %v169 = vld [vmem:[%s1 + $0x408] sm:$0xff]
    %v170 = vld [vmem:[%s1 + $0x410] sm:$0xff]
    %v171 = vld [vmem:[%s1 + $0x418] sm:$0xff]
    %v172 = vld [vmem:[%s1 + $0x420] sm:$0xff]
    %v173 = vld [vmem:[%s1 + $0x428] sm:$0xff]
    %v174 = vld [vmem:[%s1 + $0x430] sm:$0xff]
    %v175 = vld [vmem:[%s1 + $0x438] sm:$0xff]
    %v176 = vld [vmem:[%s1 + $0x440] sm:$0xff]
    %v177 = vld [vmem:[%s1 + $0x448] sm:$0xff]
    %v178 = vld [vmem:[%s1 + $0x450] sm:$0xff]
    %v179 = vld [vmem:[%s1 + $0x458] sm:$0xff]
    %v180 = vld [vmem:[%s1 + $0x460] sm:$0xff]
    %v181 = vld [vmem:[%s1 + $0x468] sm:$0xff]
    %v182 = vld [vmem:[%s1 + $0x470] sm:$0xff]
    %v183 = vld [vmem:[%s1 + $0x478] sm:$0xff]
    %v184 = vld [vmem:[%s1 + $0x480] sm:$0xff]
    %v185 = vld [vmem:[%s1 + $0x488] sm:$0xff]
    %v186 = vld [vmem:[%s1 + $0x490] sm:$0xff]
    %v187 = vld [vmem:[%s1 + $0x498] sm:$0xff]
    %v188 = vld [vmem:[%s1 + $0x4a0] sm:$0xff]
    %v189 = vld [vmem:[%s1 + $0x4a8] sm:$0xff]
    %v190 = vld [vmem:[%s1 + $0x4b0] sm:$0xff]
    %v191 = vld [vmem:[%s1 + $0x4b8] sm:$0xff]
    %v192 = vld [vmem:[%s1 + $0x4c0] sm:$0xff]
    %v193 = vld [vmem:[%s1 + $0x4c8] sm:$0xff]
    %v194 = vld [vmem:[%s1 + $0x4d0] sm:$0xff]
    %v195 = vld [vmem:[%s1 + $0x4d8] sm:$0xff]
    %v196 = vld [vmem:[%s1 + $0x4e0] sm:$0xff]
    %v197 = vld [vmem:[%s1 + $0x4e8] sm:$0xff]
    %v198 = vld [vmem:[%s1 + $0x4f0] sm:$0xff]
    %v199 = vld [vmem:[%s1 + $0x4f8] sm:$0xff]
    %v200 = vld [vmem:[%s1 + $0x500] sm:$0xff]
    %v201 = vld [vmem:[%s1 + $0x508] sm:$0xff]
    %v202 = vld [vmem:[%s1 + $0x510] sm:$0xff]
    %v203 = vld [vmem:[%s1 + $0x518] sm:$0xff]
    %v204 = vld [vmem:[%s1 + $0x520] sm:$0xff]
    %v205 = vld [vmem:[%s1 + $0x528] sm:$0xff]
    %v206 = vld [vmem:[%s1 + $0x530] sm:$0xff]
    %v207 = vld [vmem:[%s1 + $0x538] sm:$0xff]
    %v208 = vld [vmem:[%s1 + $0x540] sm:$0xff]
    %v209 = vld [vmem:[%s1 + $0x548] sm:$0xff]
    %v210 = vld [vmem:[%s1 + $0x550] sm:$0xff]
    %v211 = vld [vmem:[%s1 + $0x558] sm:$0xff]
    %v212 = vld [vmem:[%s1 + $0x560] sm:$0xff]
    %v213 = vld [vmem:[%s1 + $0x568] sm:$0xff]
    %v214 = vld [vmem:[%s1 + $0x570] sm:$0xff]
    %v215 = vld [vmem:[%s1 + $0x578] sm:$0xff]
    %v216 = vld [vmem:[%s1 + $0x580] sm:$0xff]
    %v217 = vld [vmem:[%s1 + $0x588] sm:$0xff]
    %v218 = vld [vmem:[%s1 + $0x590] sm:$0xff]
    %v219 = vld [vmem:[%s1 + $0x598] sm:$0xff]
    %v220 = vld [vmem:[%s1 + $0x5a0] sm:$0xff]
    %v221 = vld [vmem:[%s1 + $0x5a8] sm:$0xff]
    %v222 = vld [vmem:[%s1 + $0x5b0] sm:$0xff]
    %v223 = vld [vmem:[%s1 + $0x5b8] sm:$0xff]
    %v224 = vld [vmem:[%s1 + $0x5c0] sm:$0xff]
    %v225 = vld [vmem:[%s1 + $0x5c8] sm:$0xff]
    %v226 = vld [vmem:[%s1 + $0x5d0] sm:$0xff]
    %v227 = vld [vmem:[%s1 + $0x5d8] sm:$0xff]
    %v228 = vld [vmem:[%s1 + $0x5e0] sm:$0xff]
    %v229 = vld [vmem:[%s1 + $0x5e8] sm:$0xff]
    %v230 = vld [vmem:[%s1 + $0x5f0] sm:$0xff]
    %v231 = vld [vmem:[%s1 + $0x5f8] sm:$0xff]
    %v232 = vld [vmem:[%s1 + $0x600] sm:$0xff]
    %v233 = vld [vmem:[%s1 + $0x608] sm:$0xff]
    %v234 = vld [vmem:[%s1 + $0x610] sm:$0xff]
    %v235 = vld [vmem:[%s1 + $0x618] sm:$0xff]
    %v236 = vld [vmem:[%s2] sm:$0x3]
    %v238 = vlaneseq
    %v239 = vshrl.u32 %v238, 7
    %v240 = vsub.s32 0, %v239
    %v241 = vrot.slane %v236, %v240
    %v242 = vlaneseq
    %v243 = vshrl.u32 %v242, 7
    %v244 = vsub.s32 1, %v243
    %v245 = vrot.slane %v236, %v244
    %vm248 = vcmask 130048
    %v250 = vsel %vm248, %v39, 0
    %252 = vmatprep.subr.mxu0 %v71
    %253 = vmatpush1.msra.mxu0 %v70
    %254 = vmatprep.subr.mxu0 %v69
    %255 = vmatpush1.msra.mxu0 %v68
    %256 = vmatprep.subr.mxu0 %v67
    %257 = vmatpush1.msra.mxu0 %v66
    %258 = vmatprep.subr.mxu0 %v65
    %259 = vmatpush1.msra.mxu0 %v64
    %260 = vmatprep.subr.mxu0 %v63
    %261 = vmatpush1.msra.mxu0 %v62
    %262 = vmatprep.subr.mxu0 %v61
    %263 = vmatpush1.msra.mxu0 %v60
    %264 = vmatprep.subr.mxu0 %v59
    %265 = vmatpush1.msra.mxu0 %v58
    %266 = vmatprep.subr.mxu0 %v57
    %267 = vmatpush1.msra.mxu0 %v56
    %268 = vmatprep.subr.mxu0 %v55
    %269 = vmatpush1.msra.mxu0 %v54
    %270 = vmatprep.subr.mxu0 %v53
    %271 = vmatpush1.msra.mxu0 %v52
    %272 = vmatprep.subr.mxu0 %v51
    %273 = vmatpush1.msra.mxu0 %v50
    %274 = vmatprep.subr.mxu0 %v49
    %275 = vmatpush1.msra.mxu0 %v48
    %276 = vmatprep.subr.mxu0 %v47
    %277 = vmatpush1.msra.mxu0 %v46
    %278 = vmatprep.subr.mxu0 %v45
    %279 = vmatpush1.msra.mxu0 %v44
    %280 = vmatprep.subr.mxu0 %v43
    %281 = vmatpush1.msra.mxu0 %v42
    %282 = vmatprep.subr.mxu0 %v41
    %283 = vmatpush1.msra.mxu0 %v40
    %284 = vmatprep.subr.mxu0 %v103
    %285 = vmatpush2.msra.mxu0 %v102
    %286 = vmatprep.subr.mxu0 %v101
    %287 = vmatpush2.msra.mxu0 %v100
    %288 = vmatprep.subr.mxu0 %v99
    %289 = vmatpush2.msra.mxu0 %v98
    %290 = vmatprep.subr.mxu0 %v97
    %291 = vmatpush2.msra.mxu0 %v96
    %292 = vmatprep.subr.mxu0 %v95
    %293 = vmatpush2.msra.mxu0 %v94
    %294 = vmatprep.subr.mxu0 %v93
    %295 = vmatpush2.msra.mxu0 %v92
    %296 = vmatprep.subr.mxu0 %v91
    %297 = vmatpush2.msra.mxu0 %v90
    %298 = vmatprep.subr.mxu0 %v89
    %299 = vmatpush2.msra.mxu0 %v88
    %300 = vmatprep.subr.mxu0 %v87
    %301 = vmatpush2.msra.mxu0 %v86
    %302 = vmatprep.subr.mxu0 %v85
    %303 = vmatpush2.msra.mxu0 %v84
    %304 = vmatprep.subr.mxu0 %v83
    %305 = vmatpush2.msra.mxu0 %v82
    %306 = vmatprep.subr.mxu0 %v81
    %307 = vmatpush2.msra.mxu0 %v80
    %308 = vmatprep.subr.mxu0 %v79
    %309 = vmatpush2.msra.mxu0 %v78
    %310 = vmatprep.subr.mxu0 %v77
    %311 = vmatpush2.msra.mxu0 %v76
    %312 = vmatprep.subr.mxu0 %v75
    %313 = vmatpush2.msra.mxu0 %v74
    %314 = vmatprep.subr.mxu0 %v73
    %315 = vmatpush2.msra.mxu0 %v72
    %316 = vmatprep.mubr.f32.mxu0 %v34
    %317 = vmatmul.mubr.f32.gmra.mxu0 %v33
    %v318 = vpop.f32.mrf.mxu0
    %v319 = vadd.f32 %v241, %v318
    %v320 = vpop.f32.mrf.mxu0
    %v321 = vadd.f32 %v245, %v320
    %322 = vdwg.mxu0
    %323 = vmatprep.subr.mxu0 %v135
    %324 = vmatpush1.msra.mxu0 %v134
    %325 = vmatprep.subr.mxu0 %v133
    %326 = vmatpush1.msra.mxu0 %v132
    %327 = vmatprep.subr.mxu0 %v131
    %328 = vmatpush1.msra.mxu0 %v130
    %329 = vmatprep.subr.mxu0 %v129
    %330 = vmatpush1.msra.mxu0 %v128
    %331 = vmatprep.subr.mxu0 %v127
    %332 = vmatpush1.msra.mxu0 %v126
    %333 = vmatprep.subr.mxu0 %v125
    %334 = vmatpush1.msra.mxu0 %v124
    %335 = vmatprep.subr.mxu0 %v123
    %336 = vmatpush1.msra.mxu0 %v122
    %337 = vmatprep.subr.mxu0 %v121
    %338 = vmatpush1.msra.mxu0 %v120
    %339 = vmatprep.subr.mxu0 %v119
    %340 = vmatpush1.msra.mxu0 %v118
    %341 = vmatprep.subr.mxu0 %v117
    %342 = vmatpush1.msra.mxu0 %v116
    %343 = vmatprep.subr.mxu0 %v115
    %344 = vmatpush1.msra.mxu0 %v114
    %345 = vmatprep.subr.mxu0 %v113
    %346 = vmatpush1.msra.mxu0 %v112
    %347 = vmatprep.subr.mxu0 %v111
    %348 = vmatpush1.msra.mxu0 %v110
    %349 = vmatprep.subr.mxu0 %v109
    %350 = vmatpush1.msra.mxu0 %v108
    %351 = vmatprep.subr.mxu0 %v107
    %352 = vmatpush1.msra.mxu0 %v106
    %353 = vmatprep.subr.mxu0 %v105
    %354 = vmatpush1.msra.mxu0 %v104
    %355 = vmatprep.subr.mxu0 %v167
    %356 = vmatpush2.msra.mxu0 %v166
    %357 = vmatprep.subr.mxu0 %v165
    %358 = vmatpush2.msra.mxu0 %v164
    %359 = vmatprep.subr.mxu0 %v163
    %360 = vmatpush2.msra.mxu0 %v162
    %361 = vmatprep.subr.mxu0 %v161
    %362 = vmatpush2.msra.mxu0 %v160
    %363 = vmatprep.subr.mxu0 %v159
    %364 = vmatpush2.msra.mxu0 %v158
    %365 = vmatprep.subr.mxu0 %v157
    %366 = vmatpush2.msra.mxu0 %v156
    %367 = vmatprep.subr.mxu0 %v155
    %368 = vmatpush2.msra.mxu0 %v154
    %369 = vmatprep.subr.mxu0 %v153
    %370 = vmatpush2.msra.mxu0 %v152
    %371 = vmatprep.subr.mxu0 %v151
    %372 = vmatpush2.msra.mxu0 %v150
    %373 = vmatprep.subr.mxu0 %v149
    %374 = vmatpush2.msra.mxu0 %v148
    %375 = vmatprep.subr.mxu0 %v147
    %376 = vmatpush2.msra.mxu0 %v146
    %377 = vmatprep.subr.mxu0 %v145
    %378 = vmatpush2.msra.mxu0 %v144
    %379 = vmatprep.subr.mxu0 %v143
    %380 = vmatpush2.msra.mxu0 %v142
    %381 = vmatprep.subr.mxu0 %v141
    %382 = vmatpush2.msra.mxu0 %v140
    %383 = vmatprep.subr.mxu0 %v139
    %384 = vmatpush2.msra.mxu0 %v138
    %385 = vmatprep.subr.mxu0 %v137
    %386 = vmatpush2.msra.mxu0 %v136
    %387 = vmatprep.mubr.f32.mxu0 %v36
    %388 = vmatmul.mubr.f32.gmra.mxu0 %v35
    %v389 = vpop.f32.mrf.mxu0
    %v390 = vadd.f32 %v319, %v389
    %v391 = vpop.f32.mrf.mxu0
    %v392 = vadd.f32 %v321, %v391
    %393 = vdwg.mxu0
    %394 = vmatprep.subr.mxu0 %v199
    %395 = vmatpush1.msra.mxu0 %v198
    %396 = vmatprep.subr.mxu0 %v197
    %397 = vmatpush1.msra.mxu0 %v196
    %398 = vmatprep.subr.mxu0 %v195
    %399 = vmatpush1.msra.mxu0 %v194
    %400 = vmatprep.subr.mxu0 %v193
    %401 = vmatpush1.msra.mxu0 %v192
    %402 = vmatprep.subr.mxu0 %v191
    %403 = vmatpush1.msra.mxu0 %v190
    %404 = vmatprep.subr.mxu0 %v189
    %405 = vmatpush1.msra.mxu0 %v188
    %406 = vmatprep.subr.mxu0 %v187
    %407 = vmatpush1.msra.mxu0 %v186
    %408 = vmatprep.subr.mxu0 %v185
    %409 = vmatpush1.msra.mxu0 %v184
    %410 = vmatprep.subr.mxu0 %v183
    %411 = vmatpush1.msra.mxu0 %v182
    %412 = vmatprep.subr.mxu0 %v181
    %413 = vmatpush1.msra.mxu0 %v180
    %414 = vmatprep.subr.mxu0 %v179
    %415 = vmatpush1.msra.mxu0 %v178
    %416 = vmatprep.subr.mxu0 %v177
    %417 = vmatpush1.msra.mxu0 %v176
    %418 = vmatprep.subr.mxu0 %v175
    %419 = vmatpush1.msra.mxu0 %v174
    %420 = vmatprep.subr.mxu0 %v173
    %421 = vmatpush1.msra.mxu0 %v172
    %422 = vmatprep.subr.mxu0 %v171
    %423 = vmatpush1.msra.mxu0 %v170
    %424 = vmatprep.subr.mxu0 %v169
    %425 = vmatpush1.msra.mxu0 %v168
    %426 = vmatprep.subr.mxu0 %v231
    %427 = vmatpush2.msra.mxu0 %v230
    %428 = vmatprep.subr.mxu0 %v229
    %429 = vmatpush2.msra.mxu0 %v228
    %430 = vmatprep.subr.mxu0 %v227
    %431 = vmatpush2.msra.mxu0 %v226
    %432 = vmatprep.subr.mxu0 %v225
    %433 = vmatpush2.msra.mxu0 %v224
    %434 = vmatprep.subr.mxu0 %v223
    %435 = vmatpush2.msra.mxu0 %v222
    %436 = vmatprep.subr.mxu0 %v221
    %437 = vmatpush2.msra.mxu0 %v220
    %438 = vmatprep.subr.mxu0 %v219
    %439 = vmatpush2.msra.mxu0 %v218
    %440 = vmatprep.subr.mxu0 %v217
    %441 = vmatpush2.msra.mxu0 %v216
    %442 = vmatprep.subr.mxu0 %v215
    %443 = vmatpush2.msra.mxu0 %v214
    %444 = vmatprep.subr.mxu0 %v213
    %445 = vmatpush2.msra.mxu0 %v212
    %446 = vmatprep.subr.mxu0 %v211
    %447 = vmatpush2.msra.mxu0 %v210
    %448 = vmatprep.subr.mxu0 %v209
    %449 = vmatpush2.msra.mxu0 %v208
    %450 = vmatprep.subr.mxu0 %v207
    %451 = vmatpush2.msra.mxu0 %v206
    %452 = vmatprep.subr.mxu0 %v205
    %453 = vmatpush2.msra.mxu0 %v204
    %454 = vmatprep.subr.mxu0 %v203
    %455 = vmatpush2.msra.mxu0 %v202
    %456 = vmatprep.subr.mxu0 %v201
    %457 = vmatpush2.msra.mxu0 %v200
    %458 = vmatprep.mubr.f32.mxu0 %v38
    %459 = vmatmul.mubr.f32.gmra.mxu0 %v37
    %v460 = vpop.f32.mrf.mxu0
    %v461 = vadd.f32 %v390, %v460
    %v462 = vpop.f32.mrf.mxu0
    %v463 = vadd.f32 %v392, %v462
    %464 = vdwg.mxu0
    %465 = vmatprep.subr.mxu0 0.0
    %466 = vmatpush1.msra.mxu0 0.0
    %467 = vmatprep.subr.mxu0 0.0
    %468 = vmatpush1.msra.mxu0 0.0
    %469 = vmatprep.subr.mxu0 0.0
    %470 = vmatpush1.msra.mxu0 0.0
    %471 = vmatprep.subr.mxu0 0.0
    %472 = vmatpush1.msra.mxu0 0.0
    %473 = vmatprep.subr.mxu0 0.0
    %474 = vmatpush1.msra.mxu0 0.0
    %475 = vmatprep.subr.mxu0 0.0
    %476 = vmatpush1.msra.mxu0 0.0
    %477 = vmatprep.subr.mxu0 0.0
    %478 = vmatpush1.msra.mxu0 0.0
    %479 = vmatprep.subr.mxu0 0.0
    %480 = vmatpush1.msra.mxu0 0.0
    %481 = vmatprep.subr.mxu0 0.0
    %482 = vmatpush1.msra.mxu0 0.0
    %483 = vmatprep.subr.mxu0 0.0
    %484 = vmatpush1.msra.mxu0 0.0
    %485 = vmatprep.subr.mxu0 0.0
    %486 = vmatpush1.msra.mxu0 0.0
    %487 = vmatprep.subr.mxu0 0.0
    %488 = vmatpush1.msra.mxu0 0.0
    %489 = vmatprep.subr.mxu0 0.0
    %490 = vmatpush1.msra.mxu0 0.0
    %491 = vmatprep.subr.mxu0 0.0
    %492 = vmatpush1.msra.mxu0 0.0
    %493 = vmatprep.subr.mxu0 %v235
    %494 = vmatpush1.msra.mxu0 %v234
    %495 = vmatprep.subr.mxu0 %v233
    %496 = vmatpush1.msra.mxu0 %v232
    %497 = vmatprep.subr.mxu0 0.0
    %498 = vmatpush2.msra.mxu0 0.0
    %499 = vmatprep.subr.mxu0 0.0
    %500 = vmatpush2.msra.mxu0 0.0
    %501 = vmatprep.subr.mxu0 0.0
    %502 = vmatpush2.msra.mxu0 0.0
    %503 = vmatprep.subr.mxu0 0.0
    %504 = vmatpush2.msra.mxu0 0.0
    %505 = vmatprep.subr.mxu0 0.0
    %506 = vmatpush2.msra.mxu0 0.0
    %507 = vmatprep.subr.mxu0 0.0
    %508 = vmatpush2.msra.mxu0 0.0
    %509 = vmatprep.subr.mxu0 0.0
    %510 = vmatpush2.msra.mxu0 0.0
    %511 = vmatprep.subr.mxu0 0.0
    %512 = vmatpush2.msra.mxu0 0.0
    %513 = vmatprep.subr.mxu0 0.0
    %514 = vmatpush2.msra.mxu0 0.0
    %515 = vmatprep.subr.mxu0 0.0
    %516 = vmatpush2.msra.mxu0 0.0
    %517 = vmatprep.subr.mxu0 0.0
    %518 = vmatpush2.msra.mxu0 0.0
    %519 = vmatprep.subr.mxu0 0.0
    %520 = vmatpush2.msra.mxu0 0.0
    %521 = vmatprep.subr.mxu0 0.0
    %522 = vmatpush2.msra.mxu0 0.0
    %523 = vmatprep.subr.mxu0 0.0
    %524 = vmatpush2.msra.mxu0 0.0
    %525 = vmatprep.subr.mxu0 0.0
    %526 = vmatpush2.msra.mxu0 0.0
    %527 = vmatprep.subr.mxu0 0.0
    %528 = vmatpush2.msra.mxu0 0.0
    %529 = vmatprep.mubr.f32.mxu0 0.0
    %530 = vmatmul.mubr.f32.gmra.mxu0 %v250
    %v531 = vpop.f32.mrf.mxu0
    %v532 = vadd.f32 %v461, %v531
    %v533 = vpop.f32.mrf.mxu0
    %v534 = vadd.f32 %v463, %v533
    %535 = vdwg.mxu0
    %v536 = vmax.f32 %v532, 0.0
    %v537 = vmax.f32 %v534, 0.0
    %v538 = vld [vmem:[%s3] sm:$0xff]
    %v539 = vld [vmem:[%s3 + $0x8] sm:$0xff]
    %v540 = vld [vmem:[%s3 + $0x10] sm:$0xff]
    %v541 = vld [vmem:[%s3 + $0x18] sm:$0xff]
    %v542 = vld [vmem:[%s3 + $0x20] sm:$0xff]
    %v543 = vld [vmem:[%s3 + $0x28] sm:$0xff]
    %v544 = vld [vmem:[%s3 + $0x30] sm:$0xff]
    %v545 = vld [vmem:[%s3 + $0x38] sm:$0xff]
    %v546 = vld [vmem:[%s3 + $0x40] sm:$0xff]
    %v547 = vld [vmem:[%s3 + $0x48] sm:$0xff]
    %v548 = vld [vmem:[%s3 + $0x50] sm:$0xff]
    %v549 = vld [vmem:[%s3 + $0x58] sm:$0xff]
    %v550 = vld [vmem:[%s3 + $0x60] sm:$0xff]
    %v551 = vld [vmem:[%s3 + $0x68] sm:$0xff]
    %v552 = vld [vmem:[%s3 + $0x70] sm:$0xff]
    %v553 = vld [vmem:[%s3 + $0x78] sm:$0xff]
    %v554 = vld [vmem:[%s3 + $0x80] sm:$0xff]
    %v555 = vld [vmem:[%s3 + $0x88] sm:$0xff]
    %v556 = vld [vmem:[%s3 + $0x90] sm:$0xff]
    %v557 = vld [vmem:[%s3 + $0x98] sm:$0xff]
    %v558 = vld [vmem:[%s3 + $0xa0] sm:$0xff]
    %v559 = vld [vmem:[%s3 + $0xa8] sm:$0xff]
    %v560 = vld [vmem:[%s3 + $0xb0] sm:$0xff]
    %v561 = vld [vmem:[%s3 + $0xb8] sm:$0xff]
    %v562 = vld [vmem:[%s3 + $0xc0] sm:$0xff]
    %v563 = vld [vmem:[%s3 + $0xc8] sm:$0xff]
    %v564 = vld [vmem:[%s3 + $0xd0] sm:$0xff]
    %v565 = vld [vmem:[%s3 + $0xd8] sm:$0xff]
    %v566 = vld [vmem:[%s3 + $0xe0] sm:$0xff]
    %v567 = vld [vmem:[%s3 + $0xe8] sm:$0xff]
    %v568 = vld [vmem:[%s3 + $0xf0] sm:$0xff]
    %v569 = vld [vmem:[%s3 + $0xf8] sm:$0xff]
    %v570 = vld [vmem:[%s4] sm:$0x1]
    %v572 = vlaneseq
    %v573 = vshrl.u32 %v572, 7
    %v574 = vsub.s32 0, %v573
    %v575 = vrot.slane %v570, %v574
    %577 = vmatprep.subr.mxu0 0.0
    %578 = vmatpush1.msra.mxu0 %v553
    %579 = vmatprep.subr.mxu0 0.0
    %580 = vmatpush1.msra.mxu0 %v552
    %581 = vmatprep.subr.mxu0 0.0
    %582 = vmatpush1.msra.mxu0 %v551
    %583 = vmatprep.subr.mxu0 0.0
    %584 = vmatpush1.msra.mxu0 %v550
    %585 = vmatprep.subr.mxu0 0.0
    %586 = vmatpush1.msra.mxu0 %v549
    %587 = vmatprep.subr.mxu0 0.0
    %588 = vmatpush1.msra.mxu0 %v548
    %589 = vmatprep.subr.mxu0 0.0
    %590 = vmatpush1.msra.mxu0 %v547
    %591 = vmatprep.subr.mxu0 0.0
    %592 = vmatpush1.msra.mxu0 %v546
    %593 = vmatprep.subr.mxu0 0.0
    %594 = vmatpush1.msra.mxu0 %v545
    %595 = vmatprep.subr.mxu0 0.0
    %596 = vmatpush1.msra.mxu0 %v544
    %597 = vmatprep.subr.mxu0 0.0
    %598 = vmatpush1.msra.mxu0 %v543
    %599 = vmatprep.subr.mxu0 0.0
    %600 = vmatpush1.msra.mxu0 %v542
    %601 = vmatprep.subr.mxu0 0.0
    %602 = vmatpush1.msra.mxu0 %v541
    %603 = vmatprep.subr.mxu0 0.0
    %604 = vmatpush1.msra.mxu0 %v540
    %605 = vmatprep.subr.mxu0 0.0
    %606 = vmatpush1.msra.mxu0 %v539
    %607 = vmatprep.subr.mxu0 0.0
    %608 = vmatpush1.msra.mxu0 %v538
    %609 = vmatprep.subr.mxu0 0.0
    %610 = vmatpush2.msra.mxu0 %v569
    %611 = vmatprep.subr.mxu0 0.0
    %612 = vmatpush2.msra.mxu0 %v568
    %613 = vmatprep.subr.mxu0 0.0
    %614 = vmatpush2.msra.mxu0 %v567
    %615 = vmatprep.subr.mxu0 0.0
    %616 = vmatpush2.msra.mxu0 %v566
    %617 = vmatprep.subr.mxu0 0.0
    %618 = vmatpush2.msra.mxu0 %v565
    %619 = vmatprep.subr.mxu0 0.0
    %620 = vmatpush2.msra.mxu0 %v564
    %621 = vmatprep.subr.mxu0 0.0
    %622 = vmatpush2.msra.mxu0 %v563
    %623 = vmatprep.subr.mxu0 0.0
    %624 = vmatpush2.msra.mxu0 %v562
    %625 = vmatprep.subr.mxu0 0.0
    %626 = vmatpush2.msra.mxu0 %v561
    %627 = vmatprep.subr.mxu0 0.0
    %628 = vmatpush2.msra.mxu0 %v560
    %629 = vmatprep.subr.mxu0 0.0
    %630 = vmatpush2.msra.mxu0 %v559
    %631 = vmatprep.subr.mxu0 0.0
    %632 = vmatpush2.msra.mxu0 %v558
    %633 = vmatprep.subr.mxu0 0.0
    %634 = vmatpush2.msra.mxu0 %v557
    %635 = vmatprep.subr.mxu0 0.0
    %636 = vmatpush2.msra.mxu0 %v556
    %637 = vmatprep.subr.mxu0 0.0
    %638 = vmatpush2.msra.mxu0 %v555
    %639 = vmatprep.subr.mxu0 0.0
    %640 = vmatpush2.msra.mxu0 %v554
    %641 = vmatprep.mubr.f32.mxu0 %v537
    %642 = vmatmul.mubr.f32.gmra.mxu0 %v536
    %v643 = vpop.f32.mrf.mxu0
    %v644 = vadd.f32 %v575, %v643
    %v645 = vpop.f32.mrf.mxu0
    %646 = vdwg.mxu0
    %v647 = vmax.f32 %v644, 0.0
    %v648 = vld [vmem:[%s5] sm:$0xff]
    %v649 = vld [vmem:[%s5 + $0x8] sm:$0xff]
    %v650 = vld [vmem:[%s5 + $0x10] sm:$0xff]
    %v651 = vld [vmem:[%s5 + $0x18] sm:$0xff]
    %v652 = vld [vmem:[%s5 + $0x20] sm:$0xff]
    %v653 = vld [vmem:[%s5 + $0x28] sm:$0xff]
    %v654 = vld [vmem:[%s5 + $0x30] sm:$0xff]
    %v655 = vld [vmem:[%s5 + $0x38] sm:$0xff]
    %v656 = vld [vmem:[%s5 + $0x40] sm:$0xff]
    %v657 = vld [vmem:[%s5 + $0x48] sm:$0xff]
    %v658 = vld [vmem:[%s5 + $0x50] sm:$0xff]
    %v659 = vld [vmem:[%s5 + $0x58] sm:$0xff]
    %v660 = vld [vmem:[%s5 + $0x60] sm:$0xff]
    %v661 = vld [vmem:[%s5 + $0x68] sm:$0xff]
    %v662 = vld [vmem:[%s5 + $0x70] sm:$0xff]
    %v663 = vld [vmem:[%s5 + $0x78] sm:$0xff]
    %v664 = vld [vmem:[%s5 + $0x80] sm:$0xff]
    %v665 = vld [vmem:[%s5 + $0x88] sm:$0xff]
    %v666 = vld [vmem:[%s5 + $0x90] sm:$0xff]
    %v667 = vld [vmem:[%s5 + $0x98] sm:$0xff]
    %v668 = vld [vmem:[%s5 + $0xa0] sm:$0xff]
    %v669 = vld [vmem:[%s5 + $0xa8] sm:$0xff]
    %v670 = vld [vmem:[%s5 + $0xb0] sm:$0xff]
    %v671 = vld [vmem:[%s5 + $0xb8] sm:$0xff]
    %v672 = vld [vmem:[%s5 + $0xc0] sm:$0xff]
    %v673 = vld [vmem:[%s5 + $0xc8] sm:$0xff]
    %v674 = vld [vmem:[%s5 + $0xd0] sm:$0xff]
    %v675 = vld [vmem:[%s5 + $0xd8] sm:$0xff]
    %v676 = vld [vmem:[%s5 + $0xe0] sm:$0xff]
    %v677 = vld [vmem:[%s5 + $0xe8] sm:$0xff]
    %v678 = vld [vmem:[%s5 + $0xf0] sm:$0xff]
    %v679 = vld [vmem:[%s5 + $0xf8] sm:$0xff]
    %v680 = vld [vmem:[%s6] sm:$0x3]
    %v682 = vlaneseq
    %v683 = vshrl.u32 %v682, 7
    %v684 = vsub.s32 0, %v683
    %v685 = vrot.slane %v680, %v684
    %v686 = vlaneseq
    %v687 = vshrl.u32 %v686, 7
    %v688 = vsub.s32 1, %v687
    %v689 = vrot.slane %v680, %v688
    %692 = vmatprep.subr.mxu0 %v679
    %693 = vmatpush1.msra.mxu0 %v678
    %694 = vmatprep.subr.mxu0 %v677
    %695 = vmatpush1.msra.mxu0 %v676
    %696 = vmatprep.subr.mxu0 %v675
    %697 = vmatpush1.msra.mxu0 %v674
    %698 = vmatprep.subr.mxu0 %v673
    %699 = vmatpush1.msra.mxu0 %v672
    %700 = vmatprep.subr.mxu0 %v671
    %701 = vmatpush1.msra.mxu0 %v670
    %702 = vmatprep.subr.mxu0 %v669
    %703 = vmatpush1.msra.mxu0 %v668
    %704 = vmatprep.subr.mxu0 %v667
    %705 = vmatpush1.msra.mxu0 %v666
    %706 = vmatprep.subr.mxu0 %v665
    %707 = vmatpush1.msra.mxu0 %v664
    %708 = vmatprep.subr.mxu0 %v663
    %709 = vmatpush1.msra.mxu0 %v662
    %710 = vmatprep.subr.mxu0 %v661
    %711 = vmatpush1.msra.mxu0 %v660
    %712 = vmatprep.subr.mxu0 %v659
    %713 = vmatpush1.msra.mxu0 %v658
    %714 = vmatprep.subr.mxu0 %v657
    %715 = vmatpush1.msra.mxu0 %v656
    %716 = vmatprep.subr.mxu0 %v655
    %717 = vmatpush1.msra.mxu0 %v654
    %718 = vmatprep.subr.mxu0 %v653
    %719 = vmatpush1.msra.mxu0 %v652
    %720 = vmatprep.subr.mxu0 %v651
    %721 = vmatpush1.msra.mxu0 %v650
    %722 = vmatprep.subr.mxu0 %v649
    %723 = vmatpush1.msra.mxu0 %v648
    %724 = vmatprep.subr.mxu0 0.0
    %725 = vmatpush2.msra.mxu0 0.0
    %726 = vmatprep.subr.mxu0 0.0
    %727 = vmatpush2.msra.mxu0 0.0
    %728 = vmatprep.subr.mxu0 0.0
    %729 = vmatpush2.msra.mxu0 0.0
    %730 = vmatprep.subr.mxu0 0.0
    %731 = vmatpush2.msra.mxu0 0.0
    %732 = vmatprep.subr.mxu0 0.0
    %733 = vmatpush2.msra.mxu0 0.0
    %734 = vmatprep.subr.mxu0 0.0
    %735 = vmatpush2.msra.mxu0 0.0
    %736 = vmatprep.subr.mxu0 0.0
    %737 = vmatpush2.msra.mxu0 0.0
    %738 = vmatprep.subr.mxu0 0.0
    %739 = vmatpush2.msra.mxu0 0.0
    %740 = vmatprep.subr.mxu0 0.0
    %741 = vmatpush2.msra.mxu0 0.0
    %742 = vmatprep.subr.mxu0 0.0
    %743 = vmatpush2.msra.mxu0 0.0
    %744 = vmatprep.subr.mxu0 0.0
    %745 = vmatpush2.msra.mxu0 0.0
    %746 = vmatprep.subr.mxu0 0.0
    %747 = vmatpush2.msra.mxu0 0.0
    %748 = vmatprep.subr.mxu0 0.0
    %749 = vmatpush2.msra.mxu0 0.0
    %750 = vmatprep.subr.mxu0 0.0
    %751 = vmatpush2.msra.mxu0 0.0
    %752 = vmatprep.subr.mxu0 0.0
    %753 = vmatpush2.msra.mxu0 0.0
    %754 = vmatprep.subr.mxu0 0.0
    %755 = vmatpush2.msra.mxu0 0.0
    %756 = vmatprep.mubr.f32.mxu0 0.0
    %757 = vmatmul.mubr.f32.gmra.mxu0 %v647
    %v758 = vpop.f32.mrf.mxu0
    %v759 = vadd.f32 %v685, %v758
    %v760 = vpop.f32.mrf.mxu0
    %v761 = vadd.f32 %v689, %v760
    %762 = vdwg.mxu0
    %v763 = vmax.f32 %v759, 0.0
    %v764 = vmax.f32 %v761, 0.0
    %v765 = vld [vmem:[%s7] sm:$0xff]
    %v766 = vld [vmem:[%s7 + $0x8] sm:$0xff]
    %v767 = vld [vmem:[%s7 + $0x10] sm:$0xff]
    %v768 = vld [vmem:[%s7 + $0x18] sm:$0xff]
    %v769 = vld [vmem:[%s7 + $0x20] sm:$0xff]
    %v770 = vld [vmem:[%s7 + $0x28] sm:$0xff]
    %v771 = vld [vmem:[%s7 + $0x30] sm:$0xff]
    %v772 = vld [vmem:[%s7 + $0x38] sm:$0xff]
    %v773 = vld [vmem:[%s7 + $0x40] sm:$0xff]
    %v774 = vld [vmem:[%s7 + $0x48] sm:$0xff]
    %v775 = vld [vmem:[%s7 + $0x50] sm:$0xff]
    %v776 = vld [vmem:[%s7 + $0x58] sm:$0xff]
    %v777 = vld [vmem:[%s7 + $0x60] sm:$0xff]
    %v778 = vld [vmem:[%s7 + $0x68] sm:$0xff]
    %v779 = vld [vmem:[%s7 + $0x70] sm:$0xff]
    %v780 = vld [vmem:[%s7 + $0x78] sm:$0xff]
    %v781 = vld [vmem:[%s7 + $0x80] sm:$0xff]
    %v782 = vld [vmem:[%s7 + $0x88] sm:$0xff]
    %v783 = vld [vmem:[%s7 + $0x90] sm:$0xff]
    %v784 = vld [vmem:[%s7 + $0x98] sm:$0xff]
    %v785 = vld [vmem:[%s7 + $0xa0] sm:$0xff]
    %v786 = vld [vmem:[%s7 + $0xa8] sm:$0xff]
    %v787 = vld [vmem:[%s7 + $0xb0] sm:$0xff]
    %v788 = vld [vmem:[%s7 + $0xb8] sm:$0xff]
    %v789 = vld [vmem:[%s7 + $0xc0] sm:$0xff]
    %v790 = vld [vmem:[%s7 + $0xc8] sm:$0xff]
    %v791 = vld [vmem:[%s7 + $0xd0] sm:$0xff]
    %v792 = vld [vmem:[%s7 + $0xd8] sm:$0xff]
    %v793 = vld [vmem:[%s7 + $0xe0] sm:$0xff]
    %v794 = vld [vmem:[%s7 + $0xe8] sm:$0xff]
    %v795 = vld [vmem:[%s7 + $0xf0] sm:$0xff]
    %v796 = vld [vmem:[%s7 + $0xf8] sm:$0xff]
    %v797 = vld [vmem:[%s7 + $0x100] sm:$0xff]
    %v798 = vld [vmem:[%s7 + $0x108] sm:$0xff]
    %v799 = vld [vmem:[%s7 + $0x110] sm:$0xff]
    %v800 = vld [vmem:[%s7 + $0x118] sm:$0xff]
    %v801 = vld [vmem:[%s7 + $0x120] sm:$0xff]
    %v802 = vld [vmem:[%s7 + $0x128] sm:$0xff]
    %v803 = vld [vmem:[%s7 + $0x130] sm:$0xff]
    %v804 = vld [vmem:[%s7 + $0x138] sm:$0xff]
    %v805 = vld [vmem:[%s7 + $0x140] sm:$0xff]
    %v806 = vld [vmem:[%s7 + $0x148] sm:$0xff]
    %v807 = vld [vmem:[%s7 + $0x150] sm:$0xff]
    %v808 = vld [vmem:[%s7 + $0x158] sm:$0xff]
    %v809 = vld [vmem:[%s7 + $0x160] sm:$0xff]
    %v810 = vld [vmem:[%s7 + $0x168] sm:$0xff]
    %v811 = vld [vmem:[%s7 + $0x170] sm:$0xff]
    %v812 = vld [vmem:[%s7 + $0x178] sm:$0xff]
    %v813 = vld [vmem:[%s7 + $0x180] sm:$0xff]
    %v814 = vld [vmem:[%s7 + $0x188] sm:$0xff]
    %v815 = vld [vmem:[%s7 + $0x190] sm:$0xff]
    %v816 = vld [vmem:[%s7 + $0x198] sm:$0xff]
    %v817 = vld [vmem:[%s7 + $0x1a0] sm:$0xff]
    %v818 = vld [vmem:[%s7 + $0x1a8] sm:$0xff]
    %v819 = vld [vmem:[%s7 + $0x1b0] sm:$0xff]
    %v820 = vld [vmem:[%s7 + $0x1b8] sm:$0xff]
    %v821 = vld [vmem:[%s7 + $0x1c0] sm:$0xff]
    %v822 = vld [vmem:[%s7 + $0x1c8] sm:$0xff]
    %v823 = vld [vmem:[%s7 + $0x1d0] sm:$0xff]
    %v824 = vld [vmem:[%s7 + $0x1d8] sm:$0xff]
    %v825 = vld [vmem:[%s7 + $0x1e0] sm:$0xff]
    %v826 = vld [vmem:[%s7 + $0x1e8] sm:$0xff]
    %v827 = vld [vmem:[%s7 + $0x1f0] sm:$0xff]
    %v828 = vld [vmem:[%s7 + $0x1f8] sm:$0xff]
    %v829 = vld [vmem:[%s7 + $0x200] sm:$0xff]
    %v830 = vld [vmem:[%s7 + $0x208] sm:$0xff]
    %v831 = vld [vmem:[%s7 + $0x210] sm:$0xff]
    %v832 = vld [vmem:[%s7 + $0x218] sm:$0xff]
    %v833 = vld [vmem:[%s7 + $0x220] sm:$0xff]
    %v834 = vld [vmem:[%s7 + $0x228] sm:$0xff]
    %v835 = vld [vmem:[%s7 + $0x230] sm:$0xff]
    %v836 = vld [vmem:[%s7 + $0x238] sm:$0xff]
    %v837 = vld [vmem:[%s7 + $0x240] sm:$0xff]
    %v838 = vld [vmem:[%s7 + $0x248] sm:$0xff]
    %v839 = vld [vmem:[%s7 + $0x250] sm:$0xff]
    %v840 = vld [vmem:[%s7 + $0x258] sm:$0xff]
    %v841 = vld [vmem:[%s7 + $0x260] sm:$0xff]
    %v842 = vld [vmem:[%s7 + $0x268] sm:$0xff]
    %v843 = vld [vmem:[%s7 + $0x270] sm:$0xff]
    %v844 = vld [vmem:[%s7 + $0x278] sm:$0xff]
    %v845 = vld [vmem:[%s7 + $0x280] sm:$0xff]
    %v846 = vld [vmem:[%s7 + $0x288] sm:$0xff]
    %v847 = vld [vmem:[%s7 + $0x290] sm:$0xff]
    %v848 = vld [vmem:[%s7 + $0x298] sm:$0xff]
    %v849 = vld [vmem:[%s7 + $0x2a0] sm:$0xff]
    %v850 = vld [vmem:[%s7 + $0x2a8] sm:$0xff]
    %v851 = vld [vmem:[%s7 + $0x2b0] sm:$0xff]
    %v852 = vld [vmem:[%s7 + $0x2b8] sm:$0xff]
    %v853 = vld [vmem:[%s7 + $0x2c0] sm:$0xff]
    %v854 = vld [vmem:[%s7 + $0x2c8] sm:$0xff]
    %v855 = vld [vmem:[%s7 + $0x2d0] sm:$0xff]
    %v856 = vld [vmem:[%s7 + $0x2d8] sm:$0xff]
    %v857 = vld [vmem:[%s7 + $0x2e0] sm:$0xff]
    %v858 = vld [vmem:[%s7 + $0x2e8] sm:$0xff]
    %v859 = vld [vmem:[%s7 + $0x2f0] sm:$0xff]
    %v860 = vld [vmem:[%s7 + $0x2f8] sm:$0xff]
    %v861 = vld [vmem:[%s7 + $0x300] sm:$0xff]
    %v862 = vld [vmem:[%s7 + $0x308] sm:$0xff]
    %v863 = vld [vmem:[%s7 + $0x310] sm:$0xff]
    %v864 = vld [vmem:[%s7 + $0x318] sm:$0xff]
    %v865 = vld [vmem:[%s7 + $0x320] sm:$0xff]
    %v866 = vld [vmem:[%s7 + $0x328] sm:$0xff]
    %v867 = vld [vmem:[%s7 + $0x330] sm:$0xff]
    %v868 = vld [vmem:[%s7 + $0x338] sm:$0xff]
    %v869 = vld [vmem:[%s7 + $0x340] sm:$0xff]
    %v870 = vld [vmem:[%s7 + $0x348] sm:$0xff]
    %v871 = vld [vmem:[%s7 + $0x350] sm:$0xff]
    %v872 = vld [vmem:[%s7 + $0x358] sm:$0xff]
    %v873 = vld [vmem:[%s7 + $0x360] sm:$0xff]
    %v874 = vld [vmem:[%s7 + $0x368] sm:$0xff]
    %v875 = vld [vmem:[%s7 + $0x370] sm:$0xff]
    %v876 = vld [vmem:[%s7 + $0x378] sm:$0xff]
    %v877 = vld [vmem:[%s7 + $0x380] sm:$0xff]
    %v878 = vld [vmem:[%s7 + $0x388] sm:$0xff]
    %v879 = vld [vmem:[%s7 + $0x390] sm:$0xff]
    %v880 = vld [vmem:[%s7 + $0x398] sm:$0xff]
    %v881 = vld [vmem:[%s7 + $0x3a0] sm:$0xff]
    %v882 = vld [vmem:[%s7 + $0x3a8] sm:$0xff]
    %v883 = vld [vmem:[%s7 + $0x3b0] sm:$0xff]
    %v884 = vld [vmem:[%s7 + $0x3b8] sm:$0xff]
    %v885 = vld [vmem:[%s7 + $0x3c0] sm:$0xff]
    %v886 = vld [vmem:[%s7 + $0x3c8] sm:$0xff]
    %v887 = vld [vmem:[%s7 + $0x3d0] sm:$0xff]
    %v888 = vld [vmem:[%s7 + $0x3d8] sm:$0xff]
    %v889 = vld [vmem:[%s7 + $0x3e0] sm:$0xff]
    %v890 = vld [vmem:[%s7 + $0x3e8] sm:$0xff]
    %v891 = vld [vmem:[%s7 + $0x3f0] sm:$0xff]
    %v892 = vld [vmem:[%s7 + $0x3f8] sm:$0xff]
    %v893 = vld [vmem:[%s7 + $0x400] sm:$0xff]
    %v894 = vld [vmem:[%s7 + $0x408] sm:$0xff]
    %v895 = vld [vmem:[%s7 + $0x410] sm:$0xff]
    %v896 = vld [vmem:[%s7 + $0x418] sm:$0xff]
    %v897 = vld [vmem:[%s7 + $0x420] sm:$0xff]
    %v898 = vld [vmem:[%s7 + $0x428] sm:$0xff]
    %v899 = vld [vmem:[%s7 + $0x430] sm:$0xff]
    %v900 = vld [vmem:[%s7 + $0x438] sm:$0xff]
    %v901 = vld [vmem:[%s7 + $0x440] sm:$0xff]
    %v902 = vld [vmem:[%s7 + $0x448] sm:$0xff]
    %v903 = vld [vmem:[%s7 + $0x450] sm:$0xff]
    %v904 = vld [vmem:[%s7 + $0x458] sm:$0xff]
    %v905 = vld [vmem:[%s7 + $0x460] sm:$0xff]
    %v906 = vld [vmem:[%s7 + $0x468] sm:$0xff]
    %v907 = vld [vmem:[%s7 + $0x470] sm:$0xff]
    %v908 = vld [vmem:[%s7 + $0x478] sm:$0xff]
    %v909 = vld [vmem:[%s7 + $0x480] sm:$0xff]
    %v910 = vld [vmem:[%s7 + $0x488] sm:$0xff]
    %v911 = vld [vmem:[%s7 + $0x490] sm:$0xff]
    %v912 = vld [vmem:[%s7 + $0x498] sm:$0xff]
    %v913 = vld [vmem:[%s7 + $0x4a0] sm:$0xff]
    %v914 = vld [vmem:[%s7 + $0x4a8] sm:$0xff]
    %v915 = vld [vmem:[%s7 + $0x4b0] sm:$0xff]
    %v916 = vld [vmem:[%s7 + $0x4b8] sm:$0xff]
    %v917 = vld [vmem:[%s7 + $0x4c0] sm:$0xff]
    %v918 = vld [vmem:[%s7 + $0x4c8] sm:$0xff]
    %v919 = vld [vmem:[%s7 + $0x4d0] sm:$0xff]
    %v920 = vld [vmem:[%s7 + $0x4d8] sm:$0xff]
    %v921 = vld [vmem:[%s7 + $0x4e0] sm:$0xff]
    %v922 = vld [vmem:[%s7 + $0x4e8] sm:$0xff]
    %v923 = vld [vmem:[%s7 + $0x4f0] sm:$0xff]
    %v924 = vld [vmem:[%s7 + $0x4f8] sm:$0xff]
    %v925 = vld [vmem:[%s7 + $0x500] sm:$0xff]
    %v926 = vld [vmem:[%s7 + $0x508] sm:$0xff]
    %v927 = vld [vmem:[%s7 + $0x510] sm:$0xff]
    %v928 = vld [vmem:[%s7 + $0x518] sm:$0xff]
    %v929 = vld [vmem:[%s7 + $0x520] sm:$0xff]
    %v930 = vld [vmem:[%s7 + $0x528] sm:$0xff]
    %v931 = vld [vmem:[%s7 + $0x530] sm:$0xff]
    %v932 = vld [vmem:[%s7 + $0x538] sm:$0xff]
    %v933 = vld [vmem:[%s7 + $0x540] sm:$0xff]
    %v934 = vld [vmem:[%s7 + $0x548] sm:$0xff]
    %v935 = vld [vmem:[%s7 + $0x550] sm:$0xff]
    %v936 = vld [vmem:[%s7 + $0x558] sm:$0xff]
    %v937 = vld [vmem:[%s7 + $0x560] sm:$0xff]
    %v938 = vld [vmem:[%s7 + $0x568] sm:$0xff]
    %v939 = vld [vmem:[%s7 + $0x570] sm:$0xff]
    %v940 = vld [vmem:[%s7 + $0x578] sm:$0xff]
    %v941 = vld [vmem:[%s7 + $0x580] sm:$0xff]
    %v942 = vld [vmem:[%s7 + $0x588] sm:$0xff]
    %v943 = vld [vmem:[%s7 + $0x590] sm:$0xff]
    %v944 = vld [vmem:[%s7 + $0x598] sm:$0xff]
    %v945 = vld [vmem:[%s7 + $0x5a0] sm:$0xff]
    %v946 = vld [vmem:[%s7 + $0x5a8] sm:$0xff]
    %v947 = vld [vmem:[%s7 + $0x5b0] sm:$0xff]
    %v948 = vld [vmem:[%s7 + $0x5b8] sm:$0xff]
    %v949 = vld [vmem:[%s7 + $0x5c0] sm:$0xff]
    %v950 = vld [vmem:[%s7 + $0x5c8] sm:$0xff]
    %v951 = vld [vmem:[%s7 + $0x5d0] sm:$0xff]
    %v952 = vld [vmem:[%s7 + $0x5d8] sm:$0xff]
    %v953 = vld [vmem:[%s7 + $0x5e0] sm:$0xff]
    %v954 = vld [vmem:[%s7 + $0x5e8] sm:$0xff]
    %v955 = vld [vmem:[%s7 + $0x5f0] sm:$0xff]
    %v956 = vld [vmem:[%s7 + $0x5f8] sm:$0xff]
    %v957 = vld [vmem:[%s7 + $0x600] sm:$0xff]
    %v958 = vld [vmem:[%s7 + $0x608] sm:$0xff]
    %v959 = vld [vmem:[%s7 + $0x610] sm:$0xff]
    %v960 = vld [vmem:[%s7 + $0x618] sm:$0xff]
    %v961 = vld [vmem:[%s7 + $0x620] sm:$0xff]
    %v962 = vld [vmem:[%s7 + $0x628] sm:$0xff]
    %v963 = vld [vmem:[%s7 + $0x630] sm:$0xff]
    %v964 = vld [vmem:[%s7 + $0x638] sm:$0xff]
    %v965 = vld [vmem:[%s7 + $0x640] sm:$0xff]
    %v966 = vld [vmem:[%s7 + $0x648] sm:$0xff]
    %v967 = vld [vmem:[%s7 + $0x650] sm:$0xff]
    %v968 = vld [vmem:[%s7 + $0x658] sm:$0xff]
    %v969 = vld [vmem:[%s7 + $0x660] sm:$0xff]
    %v970 = vld [vmem:[%s7 + $0x668] sm:$0xff]
    %v971 = vld [vmem:[%s7 + $0x670] sm:$0xff]
    %v972 = vld [vmem:[%s7 + $0x678] sm:$0xff]
    %v973 = vld [vmem:[%s7 + $0x680] sm:$0xff]
    %v974 = vld [vmem:[%s7 + $0x688] sm:$0xff]
    %v975 = vld [vmem:[%s7 + $0x690] sm:$0xff]
    %v976 = vld [vmem:[%s7 + $0x698] sm:$0xff]
    %v977 = vld [vmem:[%s7 + $0x6a0] sm:$0xff]
    %v978 = vld [vmem:[%s7 + $0x6a8] sm:$0xff]
    %v979 = vld [vmem:[%s7 + $0x6b0] sm:$0xff]
    %v980 = vld [vmem:[%s7 + $0x6b8] sm:$0xff]
    %v981 = vld [vmem:[%s7 + $0x6c0] sm:$0xff]
    %v982 = vld [vmem:[%s7 + $0x6c8] sm:$0xff]
    %v983 = vld [vmem:[%s7 + $0x6d0] sm:$0xff]
    %v984 = vld [vmem:[%s7 + $0x6d8] sm:$0xff]
    %v985 = vld [vmem:[%s7 + $0x6e0] sm:$0xff]
    %v986 = vld [vmem:[%s7 + $0x6e8] sm:$0xff]
    %v987 = vld [vmem:[%s7 + $0x6f0] sm:$0xff]
    %v988 = vld [vmem:[%s7 + $0x6f8] sm:$0xff]
    %v989 = vld [vmem:[%s8] sm:$0x7f]
    %v991 = vlaneseq
    %v992 = vshrl.u32 %v991, 7
    %v993 = vsub.s32 0, %v992
    %v994 = vrot.slane %v989, %v993
    %v995 = vlaneseq
    %v996 = vshrl.u32 %v995, 7
    %v997 = vsub.s32 1, %v996
    %v998 = vrot.slane %v989, %v997
    %v999 = vlaneseq
    %v1000 = vshrl.u32 %v999, 7
    %v1001 = vsub.s32 2, %v1000
    %v1002 = vrot.slane %v989, %v1001
    %v1003 = vlaneseq
    %v1004 = vshrl.u32 %v1003, 7
    %v1005 = vsub.s32 3, %v1004
    %v1006 = vrot.slane %v989, %v1005
    %v1007 = vlaneseq
    %v1008 = vshrl.u32 %v1007, 7
    %v1009 = vsub.s32 4, %v1008
    %v1010 = vrot.slane %v989, %v1009
    %v1011 = vlaneseq
    %v1012 = vshrl.u32 %v1011, 7
    %v1013 = vsub.s32 5, %v1012
    %v1014 = vrot.slane %v989, %v1013
    %v1015 = vlaneseq
    %v1016 = vshrl.u32 %v1015, 7
    %v1017 = vsub.s32 6, %v1016
    %v1018 = vrot.slane %v989, %v1017
    %1026 = vmatprep.subr.mxu0 %v871
    %1027 = vmatpush1.msra.mxu0 %v870
    %1028 = vmatprep.subr.mxu0 %v864
    %1029 = vmatpush1.msra.mxu0 %v863
    %1030 = vmatprep.subr.mxu0 %v857
    %1031 = vmatpush1.msra.mxu0 %v856
    %1032 = vmatprep.subr.mxu0 %v850
    %1033 = vmatpush1.msra.mxu0 %v849
    %1034 = vmatprep.subr.mxu0 %v843
    %1035 = vmatpush1.msra.mxu0 %v842
    %1036 = vmatprep.subr.mxu0 %v836
    %1037 = vmatpush1.msra.mxu0 %v835
    %1038 = vmatprep.subr.mxu0 %v829
    %1039 = vmatpush1.msra.mxu0 %v828
    %1040 = vmatprep.subr.mxu0 %v822
    %1041 = vmatpush1.msra.mxu0 %v821
    %1042 = vmatprep.subr.mxu0 %v815
    %1043 = vmatpush1.msra.mxu0 %v814
    %1044 = vmatprep.subr.mxu0 %v808
    %1045 = vmatpush1.msra.mxu0 %v807
    %1046 = vmatprep.subr.mxu0 %v801
    %1047 = vmatpush1.msra.mxu0 %v800
    %1048 = vmatprep.subr.mxu0 %v794
    %1049 = vmatpush1.msra.mxu0 %v793
    %1050 = vmatprep.subr.mxu0 %v787
    %1051 = vmatpush1.msra.mxu0 %v786
    %1052 = vmatprep.subr.mxu0 %v780
    %1053 = vmatpush1.msra.mxu0 %v779
    %1054 = vmatprep.subr.mxu0 %v773
    %1055 = vmatpush1.msra.mxu0 %v772
    %1056 = vmatprep.subr.mxu0 %v766
    %1057 = vmatpush1.msra.mxu0 %v765
    %1058 = vmatprep.subr.mxu0 %v983
    %1059 = vmatpush2.msra.mxu0 %v982
    %1060 = vmatprep.subr.mxu0 %v976
    %1061 = vmatpush2.msra.mxu0 %v975
    %1062 = vmatprep.subr.mxu0 %v969
    %1063 = vmatpush2.msra.mxu0 %v968
    %1064 = vmatprep.subr.mxu0 %v962
    %1065 = vmatpush2.msra.mxu0 %v961
    %1066 = vmatprep.subr.mxu0 %v955
    %1067 = vmatpush2.msra.mxu0 %v954
    %1068 = vmatprep.subr.mxu0 %v948
    %1069 = vmatpush2.msra.mxu0 %v947
    %1070 = vmatprep.subr.mxu0 %v941
    %1071 = vmatpush2.msra.mxu0 %v940
    %1072 = vmatprep.subr.mxu0 %v934
    %1073 = vmatpush2.msra.mxu0 %v933
    %1074 = vmatprep.subr.mxu0 %v927
    %1075 = vmatpush2.msra.mxu0 %v926
    %1076 = vmatprep.subr.mxu0 %v920
    %1077 = vmatpush2.msra.mxu0 %v919
    %1078 = vmatprep.subr.mxu0 %v913
    %1079 = vmatpush2.msra.mxu0 %v912
    %1080 = vmatprep.subr.mxu0 %v906
    %1081 = vmatpush2.msra.mxu0 %v905
    %1082 = vmatprep.subr.mxu0 %v899
    %1083 = vmatpush2.msra.mxu0 %v898
    %1084 = vmatprep.subr.mxu0 %v892
    %1085 = vmatpush2.msra.mxu0 %v891
    %1086 = vmatprep.subr.mxu0 %v885
    %1087 = vmatpush2.msra.mxu0 %v884
    %1088 = vmatprep.subr.mxu0 %v878
    %1089 = vmatpush2.msra.mxu0 %v877
    %1090 = vmatprep.mubr.f32.mxu0 %v764
    %1091 = vmatmul.mubr.f32.gmra.mxu0 %v763
    %v1092 = vpop.f32.mrf.mxu0
    %v1093 = vadd.f32 %v994, %v1092
    %v1094 = vpop.f32.mrf.mxu0
    %v1095 = vadd.f32 %v998, %v1094
    %1096 = vdwg.mxu0
    %1097 = vmatprep.subr.mxu0 %v873
    %1098 = vmatpush1.msra.mxu0 %v872
    %1099 = vmatprep.subr.mxu0 %v866
    %1100 = vmatpush1.msra.mxu0 %v865
    %1101 = vmatprep.subr.mxu0 %v859
    %1102 = vmatpush1.msra.mxu0 %v858
    %1103 = vmatprep.subr.mxu0 %v852
    %1104 = vmatpush1.msra.mxu0 %v851
    %1105 = vmatprep.subr.mxu0 %v845
    %1106 = vmatpush1.msra.mxu0 %v844
    %1107 = vmatprep.subr.mxu0 %v838
    %1108 = vmatpush1.msra.mxu0 %v837
    %1109 = vmatprep.subr.mxu0 %v831
    %1110 = vmatpush1.msra.mxu0 %v830
    %1111 = vmatprep.subr.mxu0 %v824
    %1112 = vmatpush1.msra.mxu0 %v823
    %1113 = vmatprep.subr.mxu0 %v817
    %1114 = vmatpush1.msra.mxu0 %v816
    %1115 = vmatprep.subr.mxu0 %v810
    %1116 = vmatpush1.msra.mxu0 %v809
    %1117 = vmatprep.subr.mxu0 %v803
    %1118 = vmatpush1.msra.mxu0 %v802
    %1119 = vmatprep.subr.mxu0 %v796
    %1120 = vmatpush1.msra.mxu0 %v795
    %1121 = vmatprep.subr.mxu0 %v789
    %1122 = vmatpush1.msra.mxu0 %v788
    %1123 = vmatprep.subr.mxu0 %v782
    %1124 = vmatpush1.msra.mxu0 %v781
    %1125 = vmatprep.subr.mxu0 %v775
    %1126 = vmatpush1.msra.mxu0 %v774
    %1127 = vmatprep.subr.mxu0 %v768
    %1128 = vmatpush1.msra.mxu0 %v767
    %1129 = vmatprep.subr.mxu0 %v985
    %1130 = vmatpush2.msra.mxu0 %v984
    %1131 = vmatprep.subr.mxu0 %v978
    %1132 = vmatpush2.msra.mxu0 %v977
    %1133 = vmatprep.subr.mxu0 %v971
    %1134 = vmatpush2.msra.mxu0 %v970
    %1135 = vmatprep.subr.mxu0 %v964
    %1136 = vmatpush2.msra.mxu0 %v963
    %1137 = vmatprep.subr.mxu0 %v957
    %1138 = vmatpush2.msra.mxu0 %v956
    %1139 = vmatprep.subr.mxu0 %v950
    %1140 = vmatpush2.msra.mxu0 %v949
    %1141 = vmatprep.subr.mxu0 %v943
    %1142 = vmatpush2.msra.mxu0 %v942
    %1143 = vmatprep.subr.mxu0 %v936
    %1144 = vmatpush2.msra.mxu0 %v935
    %1145 = vmatprep.subr.mxu0 %v929
    %1146 = vmatpush2.msra.mxu0 %v928
    %1147 = vmatprep.subr.mxu0 %v922
    %1148 = vmatpush2.msra.mxu0 %v921
    %1149 = vmatprep.subr.mxu0 %v915
    %1150 = vmatpush2.msra.mxu0 %v914
    %1151 = vmatprep.subr.mxu0 %v908
    %1152 = vmatpush2.msra.mxu0 %v907
    %1153 = vmatprep.subr.mxu0 %v901
    %1154 = vmatpush2.msra.mxu0 %v900
    %1155 = vmatprep.subr.mxu0 %v894
    %1156 = vmatpush2.msra.mxu0 %v893
    %1157 = vmatprep.subr.mxu0 %v887
    %1158 = vmatpush2.msra.mxu0 %v886
    %1159 = vmatprep.subr.mxu0 %v880
    %1160 = vmatpush2.msra.mxu0 %v879
    %1161 = vmatprep.mubr.f32.mxu0 %v764
    %1162 = vmatmul.mubr.f32.gmra.mxu0 %v763
    %v1163 = vpop.f32.mrf.mxu0
    %v1164 = vadd.f32 %v1002, %v1163
    %v1165 = vpop.f32.mrf.mxu0
    %v1166 = vadd.f32 %v1006, %v1165
    %1167 = vdwg.mxu0
    %1168 = vmatprep.subr.mxu0 %v875
    %1169 = vmatpush1.msra.mxu0 %v874
    %1170 = vmatprep.subr.mxu0 %v868
    %1171 = vmatpush1.msra.mxu0 %v867
    %1172 = vmatprep.subr.mxu0 %v861
    %1173 = vmatpush1.msra.mxu0 %v860
    %1174 = vmatprep.subr.mxu0 %v854
    %1175 = vmatpush1.msra.mxu0 %v853
    %1176 = vmatprep.subr.mxu0 %v847
    %1177 = vmatpush1.msra.mxu0 %v846
    %1178 = vmatprep.subr.mxu0 %v840
    %1179 = vmatpush1.msra.mxu0 %v839
    %1180 = vmatprep.subr.mxu0 %v833
    %1181 = vmatpush1.msra.mxu0 %v832
    %1182 = vmatprep.subr.mxu0 %v826
    %1183 = vmatpush1.msra.mxu0 %v825
    %1184 = vmatprep.subr.mxu0 %v819
    %1185 = vmatpush1.msra.mxu0 %v818
    %1186 = vmatprep.subr.mxu0 %v812
    %1187 = vmatpush1.msra.mxu0 %v811
    %1188 = vmatprep.subr.mxu0 %v805
    %1189 = vmatpush1.msra.mxu0 %v804
    %1190 = vmatprep.subr.mxu0 %v798
    %1191 = vmatpush1.msra.mxu0 %v797
    %1192 = vmatprep.subr.mxu0 %v791
    %1193 = vmatpush1.msra.mxu0 %v790
    %1194 = vmatprep.subr.mxu0 %v784
    %1195 = vmatpush1.msra.mxu0 %v783
    %1196 = vmatprep.subr.mxu0 %v777
    %1197 = vmatpush1.msra.mxu0 %v776
    %1198 = vmatprep.subr.mxu0 %v770
    %1199 = vmatpush1.msra.mxu0 %v769
    %1200 = vmatprep.subr.mxu0 %v987
    %1201 = vmatpush2.msra.mxu0 %v986
    %1202 = vmatprep.subr.mxu0 %v980
    %1203 = vmatpush2.msra.mxu0 %v979
    %1204 = vmatprep.subr.mxu0 %v973
    %1205 = vmatpush2.msra.mxu0 %v972
    %1206 = vmatprep.subr.mxu0 %v966
    %1207 = vmatpush2.msra.mxu0 %v965
    %1208 = vmatprep.subr.mxu0 %v959
    %1209 = vmatpush2.msra.mxu0 %v958
    %1210 = vmatprep.subr.mxu0 %v952
    %1211 = vmatpush2.msra.mxu0 %v951
    %1212 = vmatprep.subr.mxu0 %v945
    %1213 = vmatpush2.msra.mxu0 %v944
    %1214 = vmatprep.subr.mxu0 %v938
    %1215 = vmatpush2.msra.mxu0 %v937
    %1216 = vmatprep.subr.mxu0 %v931
    %1217 = vmatpush2.msra.mxu0 %v930
    %1218 = vmatprep.subr.mxu0 %v924
    %1219 = vmatpush2.msra.mxu0 %v923
    %1220 = vmatprep.subr.mxu0 %v917
    %1221 = vmatpush2.msra.mxu0 %v916
    %1222 = vmatprep.subr.mxu0 %v910
    %1223 = vmatpush2.msra.mxu0 %v909
    %1224 = vmatprep.subr.mxu0 %v903
    %1225 = vmatpush2.msra.mxu0 %v902
    %1226 = vmatprep.subr.mxu0 %v896
    %1227 = vmatpush2.msra.mxu0 %v895
    %1228 = vmatprep.subr.mxu0 %v889
    %1229 = vmatpush2.msra.mxu0 %v888
    %1230 = vmatprep.subr.mxu0 %v882
    %1231 = vmatpush2.msra.mxu0 %v881
    %1232 = vmatprep.mubr.f32.mxu0 %v764
    %1233 = vmatmul.mubr.f32.gmra.mxu0 %v763
    %v1234 = vpop.f32.mrf.mxu0
    %v1235 = vadd.f32 %v1010, %v1234
    %v1236 = vpop.f32.mrf.mxu0
    %v1237 = vadd.f32 %v1014, %v1236
    %1238 = vdwg.mxu0
    %1239 = vmatprep.subr.mxu0 0.0
    %1240 = vmatpush1.msra.mxu0 %v876
    %1241 = vmatprep.subr.mxu0 0.0
    %1242 = vmatpush1.msra.mxu0 %v869
    %1243 = vmatprep.subr.mxu0 0.0
    %1244 = vmatpush1.msra.mxu0 %v862
    %1245 = vmatprep.subr.mxu0 0.0
    %1246 = vmatpush1.msra.mxu0 %v855
    %1247 = vmatprep.subr.mxu0 0.0
    %1248 = vmatpush1.msra.mxu0 %v848
    %1249 = vmatprep.subr.mxu0 0.0
    %1250 = vmatpush1.msra.mxu0 %v841
    %1251 = vmatprep.subr.mxu0 0.0
    %1252 = vmatpush1.msra.mxu0 %v834
    %1253 = vmatprep.subr.mxu0 0.0
    %1254 = vmatpush1.msra.mxu0 %v827
    %1255 = vmatprep.subr.mxu0 0.0
    %1256 = vmatpush1.msra.mxu0 %v820
    %1257 = vmatprep.subr.mxu0 0.0
    %1258 = vmatpush1.msra.mxu0 %v813
    %1259 = vmatprep.subr.mxu0 0.0
    %1260 = vmatpush1.msra.mxu0 %v806
    %1261 = vmatprep.subr.mxu0 0.0
    %1262 = vmatpush1.msra.mxu0 %v799
    %1263 = vmatprep.subr.mxu0 0.0
    %1264 = vmatpush1.msra.mxu0 %v792
    %1265 = vmatprep.subr.mxu0 0.0
    %1266 = vmatpush1.msra.mxu0 %v785
    %1267 = vmatprep.subr.mxu0 0.0
    %1268 = vmatpush1.msra.mxu0 %v778
    %1269 = vmatprep.subr.mxu0 0.0
    %1270 = vmatpush1.msra.mxu0 %v771
    %1271 = vmatprep.subr.mxu0 0.0
    %1272 = vmatpush2.msra.mxu0 %v988
    %1273 = vmatprep.subr.mxu0 0.0
    %1274 = vmatpush2.msra.mxu0 %v981
    %1275 = vmatprep.subr.mxu0 0.0
    %1276 = vmatpush2.msra.mxu0 %v974
    %1277 = vmatprep.subr.mxu0 0.0
    %1278 = vmatpush2.msra.mxu0 %v967
    %1279 = vmatprep.subr.mxu0 0.0
    %1280 = vmatpush2.msra.mxu0 %v960
    %1281 = vmatprep.subr.mxu0 0.0
    %1282 = vmatpush2.msra.mxu0 %v953
    %1283 = vmatprep.subr.mxu0 0.0
    %1284 = vmatpush2.msra.mxu0 %v946
    %1285 = vmatprep.subr.mxu0 0.0
    %1286 = vmatpush2.msra.mxu0 %v939
    %1287 = vmatprep.subr.mxu0 0.0
    %1288 = vmatpush2.msra.mxu0 %v932
    %1289 = vmatprep.subr.mxu0 0.0
    %1290 = vmatpush2.msra.mxu0 %v925
    %1291 = vmatprep.subr.mxu0 0.0
    %1292 = vmatpush2.msra.mxu0 %v918
    %1293 = vmatprep.subr.mxu0 0.0
    %1294 = vmatpush2.msra.mxu0 %v911
    %1295 = vmatprep.subr.mxu0 0.0
    %1296 = vmatpush2.msra.mxu0 %v904
    %1297 = vmatprep.subr.mxu0 0.0
    %1298 = vmatpush2.msra.mxu0 %v897
    %1299 = vmatprep.subr.mxu0 0.0
    %1300 = vmatpush2.msra.mxu0 %v890
    %1301 = vmatprep.subr.mxu0 0.0
    %1302 = vmatpush2.msra.mxu0 %v883
    %1303 = vmatprep.mubr.f32.mxu0 %v764
    %1304 = vmatmul.mubr.f32.gmra.mxu0 %v763
    %v1305 = vpop.f32.mrf.mxu0
    %v1306 = vadd.f32 %v1018, %v1305
    %v1307 = vpop.f32.mrf.mxu0
    %1308 = vdwg.mxu0
    %v1309 = vxor.u32 %v1093, 2147483648
    %v1310 = vxor.u32 %v1095, 2147483648
    %v1311 = vxor.u32 %v1164, 2147483648
    %v1312 = vxor.u32 %v1166, 2147483648
    %v1313 = vxor.u32 %v1235, 2147483648
    %v1314 = vxor.u32 %v1237, 2147483648
    %v1315 = vxor.u32 %v1306, 2147483648
    %v1316 = vmul.f32 %v1309, 1.442695
    %v1317 = vpow.pop %v1316
    %v1318 = vmul.f32 %v1310, 1.442695
    %v1319 = vpow.pop %v1318
    %v1320 = vmul.f32 %v1311, 1.442695
    %v1321 = vpow.pop %v1320
    %v1322 = vmul.f32 %v1312, 1.442695
    %v1323 = vpow.pop %v1322
    %v1324 = vmul.f32 %v1313, 1.442695
    %v1325 = vpow.pop %v1324
    %v1326 = vmul.f32 %v1314, 1.442695
    %v1327 = vpow.pop %v1326
    %v1328 = vmul.f32 %v1315, 1.442695
    %v1329 = vpow.pop %v1328
    %v1330 = vadd.f32 %v1317, 1.0
    %v1331 = vadd.f32 %v1319, 1.0
    %v1332 = vadd.f32 %v1321, 1.0
    %v1333 = vadd.f32 %v1323, 1.0
    %v1334 = vadd.f32 %v1325, 1.0
    %v1335 = vadd.f32 %v1327, 1.0
    %v1336 = vadd.f32 %v1329, 1.0
    %v1337 = vrcp.pop %v1330
    %v1338 = vmul.f32 1.0, %v1337
    %v1339 = vrcp.pop %v1331
    %v1340 = vmul.f32 1.0, %v1339
    %v1341 = vrcp.pop %v1332
    %v1342 = vmul.f32 1.0, %v1341
    %v1343 = vrcp.pop %v1333
    %v1344 = vmul.f32 1.0, %v1343
    %v1345 = vrcp.pop %v1334
    %v1346 = vmul.f32 1.0, %v1345
    %v1347 = vrcp.pop %v1335
    %v1348 = vmul.f32 1.0, %v1347
    %v1349 = vrcp.pop %v1336
    %v1350 = vmul.f32 1.0, %v1349
    %1351 = vst [vmem:[#allocation2] sm:$0xff] %v1338
    %1352 = vst [vmem:[#allocation2 + $0x8] sm:$0xff] %v1340
    %1353 = vst [vmem:[#allocation2 + $0x10] sm:$0xff] %v1342
    %1354 = vst [vmem:[#allocation2 + $0x18] sm:$0xff] %v1344
    %1355 = vst [vmem:[#allocation2 + $0x20] sm:$0xff] %v1346
    %1356 = vst [vmem:[#allocation2 + $0x28] sm:$0xff] %v1348
    %1357 = vst.msk [vmem:[#allocation2 + $0x30] sm:$0xff] %vm248, %v1350
    // Predicated region
    $region38: #{dae_forward.1} parent=1 // pred_check
      _
    $region39: #{dae_forward.1} parent=1 // pred_check_branch
      %1359 = sbr.rel (0) target = $region41
    $region40: #{dae_forward.1} parent=1 // pred_region
      %s1361 = ssub.s32 896, 896
      %1362 = vsyncadd [#allocation3], %s1361
      %s1364 = sshll.u32 [#allocation2], 4
      %s1365 = int_to_ptr.vmem [resolvable:$true] %s1364
      %1367 = dma.vmem_to_hbm [thread:$0]  %s1365, 896, %s9, [#allocation3]
    $region41: #{dae_forward.1} parent=1 // pred_fallthru
      _
    // Predicated region
    $region42: #{dae_forward.1} parent=1 // pred_check
      _
    $region43: #{dae_forward.1} parent=1 // pred_check_branch
      %1369 = sbr.rel (0) target = $region45
    $region44: #{dae_forward.1} parent=1 // pred_region
      %1370 = dma.done [#allocation3], 896
    $region45: #{dae_forward.1} parent=1 // pred_fallthru
      _
    %1371 = vsyncpa [#allocation3], 1

</llo_original>
